<compile_context>
chip_gen: v7x
topology: tpu7x:2x2x1
jax: 0.10.0
libtpu: 0.0.40
codegen_flags: <defaults>
</compile_context>

<pallas_src>
from collections import OrderedDict
from functools import partial

import jax
import jax.numpy as jnp
from jax.experimental import pallas as pl
from jax.experimental.pallas import tpu as pltpu


# --------------------------------------------------------------------------
# Fused conv-stem (3x3 "same" conv, im2col in-kernel) + bias + ReLU + GAP.
# One grid step per image; everything stays in VMEM / vregs.
# --------------------------------------------------------------------------
def _conv_gap_kernel(x_ref, w_ref, b_ref, s_ref, o_ref, *, H, W):
    Wp = W + 2                 # padded row length
    R_out = H * Wp             # rows of the (width-padded) output slab
    xflat = x_ref[0]           # ((H+3)*(W+2), Cin) bf16 flattened padded image

    # In-kernel im2col: 9 statically shifted slices, concatenated along lanes.
    cols = []
    for di in range(3):
        for dj in range(3):
            off = di * Wp + dj
            cols.append(xflat[off:off + R_out, :])
    patches = jnp.concatenate(cols, axis=-1)        # (R_out, 9*Cin) bf16

    acc = jnp.dot(patches, w_ref[...], preferred_element_type=jnp.float32)
    act = jnp.maximum(acc + b_ref[...], 0.0)        # fused bias + ReLU

    # Fused masked global-average-pool: s_ref holds 1/(H*W) on valid columns
    # and 0 on the width-padding columns of the slab.
    o_ref[...] = jnp.sum(act * s_ref[...], axis=0, keepdims=True)[None]


def pallas_conv_gap(xflat, scale, w, b, H, W):
    """xflat: (N, (H+3)*(W+2), Cin) bf16 flattened padded NHWC images.
    Returns gp_feat = GAP(ReLU(conv3x3(x) + b)) of shape (N, width), f32."""
    N, R_in, Cin = xflat.shape
    width = w.shape[-1]
    R_out = H * (W + 2)
    out = pl.pallas_call(
        partial(_conv_gap_kernel, H=H, W=W),
        out_shape=jax.ShapeDtypeStruct((N, 1, width), jnp.float32),
        grid=(N,),
        in_specs=[
            pl.BlockSpec((1, R_in, Cin), lambda n: (n, 0, 0)),
            pl.BlockSpec((9 * Cin, width), lambda n: (0, 0)),
            pl.BlockSpec((1, width), lambda n: (0, 0)),
            pl.BlockSpec((R_out, 1), lambda n: (0, 0)),
        ],
        out_specs=pl.BlockSpec((1, 1, width), lambda n: (n, 0, 0)),
        compiler_params=pltpu.CompilerParams(
            dimension_semantics=("parallel",),        # v7x: use both TCs
            vmem_limit_bytes=32 * 1024 * 1024),
    )(xflat, w, b, scale)
    return out.reshape(N, width)


# --------------------------------------------------------------------------
# Fused MLP head: chain of (matmul + bias [+ ReLU]) in a single kernel.
# --------------------------------------------------------------------------
def _mlp_kernel(*refs, relu_flags):
    x_ref, o_ref = refs[0], refs[-1]
    h = x_ref[...]
    for i, relu in enumerate(relu_flags):
        w_ref, b_ref = refs[1 + 2 * i], refs[2 + 2 * i]
        h = jnp.dot(h.astype(w_ref.dtype), w_ref[...],
                    preferred_element_type=jnp.float32) + b_ref[...]
        if relu:
            h = jnp.maximum(h, 0.0)
    o_ref[...] = h.astype(o_ref.dtype)


def pallas_mlp(x, layers):
    """layers = [(w_bf16 (K, N), b_f32 (1, N), relu_bool), ...] — fused chain."""
    M = x.shape[0]
    out_dim = layers[-1][0].shape[1]
    relu_flags = tuple(bool(r) for _, _, r in layers)
    args = [x]
    in_specs = [pl.BlockSpec(x.shape, lambda i: (0, 0))]
    for w, b, _ in layers:
        args.extend([w, b])
        in_specs.append(pl.BlockSpec(w.shape, lambda i: (0, 0)))
        in_specs.append(pl.BlockSpec(b.shape, lambda i: (0, 0)))
    return pl.pallas_call(
        partial(_mlp_kernel, relu_flags=relu_flags),
        out_shape=jax.ShapeDtypeStruct((M, out_dim), jnp.float32),
        grid=(1,),
        in_specs=in_specs,
        out_specs=pl.BlockSpec((M, out_dim), lambda i: (0, 0)),
        compiler_params=pltpu.CompilerParams(
            dimension_semantics=("arbitrary",)),
    )(*args)


# --------------------------------------------------------------------------
# Host-side glue (done once per forward, shared by both encoder branches).
# --------------------------------------------------------------------------
def preprocess_input(x_nchw):
    """NCHW -> flattened, zero-padded bf16 NHWC slab + GAP scale mask."""
    N, Cin, H, W = x_nchw.shape
    x = jnp.transpose(x_nchw, (0, 2, 3, 1))                     # NHWC
    # 1-pixel halo (+1 extra bottom row so the in-kernel shifted slices of the
    # flattened slab stay in bounds).
    xp = jnp.pad(x, ((0, 0), (1, 2), (1, 1), (0, 0)))
    Hp, Wp = H + 3, W + 2
    xflat = xp.reshape(N, Hp * Wp, Cin).astype(jnp.bfloat16)
    col = jnp.arange(H * Wp, dtype=jnp.int32) % Wp
    scale = jnp.where(col < W, 1.0 / (H * W), 0.0)
    scale = scale.astype(jnp.float32).reshape(H * Wp, 1)
    return xflat, scale, H, W


def prepare_params(params):
    """One-time cast: weights -> bf16, biases -> (1, N) f32."""
    cp = {}
    for k, v in params.items():
        if k.endswith("_w"):
            cp[k] = v.astype(jnp.bfloat16)
        else:
            cp[k] = v.reshape(1, -1).astype(jnp.float32)
    return cp


def encoder_forward(cp, prep, *, use_predictor):
    """Stand-in encoder: conv3x3 + ReLU -> GAP -> MLP proj [-> predictor]."""
    xflat, scale, H, W = prep
    gp_feat = pallas_conv_gap(xflat, scale, cp["conv_w"], cp["conv_b"], H, W)
    layers = [(cp["fc1_w"], cp["fc1_b"], True),
              (cp["fc2_w"], cp["fc2_b"], False)]
    if use_predictor:
        layers += [(cp["pred1_w"], cp["pred1_b"], True),
                   (cp["pred2_w"], cp["pred2_b"], False)]
    out = pallas_mlp(gp_feat, layers)
    return out, gp_feat


# --------------------------------------------------------------------------
# SiameseNetwork equivalent
# --------------------------------------------------------------------------
def momentum_update(online_params, target_params, m):
    """target <- m * target + (1 - m) * online (over shared parameters)."""
    return {k: m * v + (1.0 - m) * online_params[k]
            for k, v in target_params.items()}


@partial(jax.jit, static_argnames=("CLS",))
def _siamese_core(online_params, target_params, x_all, *, CLS):
    online_cp = prepare_params(online_params)
    target_cp = prepare_params(target_params)
    prep = preprocess_input(x_all)          # shared by online & target branch
    online_all, gp_all = encoder_forward(online_cp, prep, use_predictor=True)
    # torch.no_grad() on the target branch -> stop_gradient; no predictor head.
    target_all = jax.lax.stop_gradient(
        encoder_forward(target_cp, prep, use_predictor=False)[0])
    if CLS:
        return online_all, target_all, gp_all
    return online_all, target_all


def siamese_forward(online_params, target_params, inps, *, CLS):
    n_views, B = len(inps), inps[0].shape[0]
    x_all = jnp.concatenate(inps, axis=0)   # batch both views: one pass each
    res = _siamese_core(online_params, target_params, x_all, CLS=CLS)
    online_all, target_all = res[0], res[1]
    output_dict = OrderedDict()
    for i in range(n_views):
        output_dict["online{}".format(i + 1)] = online_all[i * B:(i + 1) * B]
    for i in range(n_views):
        output_dict["target{}".format(i + 1)] = target_all[i * B:(i + 1) * B]
    if CLS:
        # reference semantics: gp_feat is the one from the LAST input view
        output_dict["gp_feat"] = res[2][(n_views - 1) * B:n_views * B]
    return output_dict


# --------------------------------------------------------------------------
# Deterministic parameter construction
# --------------------------------------------------------------------------
def init_params(key, cin, width, hidden_dim, low_dim):
    ks = jax.random.split(key, 6)

    def w(k, shape):
        return (jax.random.normal(k, shape, jnp.float32)
                / jnp.sqrt(jnp.float32(shape[0])))

    online = {
        "conv_w": w(ks[0], (9 * cin, width)),
        "conv_b": jnp.zeros((width,), jnp.float32),
        "fc1_w": w(ks[1], (width, hidden_dim)),
        "fc1_b": jnp.zeros((hidden_dim,), jnp.float32),
        "fc2_w": w(ks[2], (hidden_dim, low_dim)),
        "fc2_b": jnp.zeros((low_dim,), jnp.float32),
        "pred1_w": w(ks[3], (low_dim, hidden_dim)),
        "pred1_b": jnp.zeros((hidden_dim,), jnp.float32),
        "pred2_w": w(ks[4], (hidden_dim, low_dim)),
        "pred2_b": jnp.zeros((low_dim,), jnp.float32),
    }
    # target encoder has no predictor head (predictor['target'] = False)
    target = {k: jax.random.normal(ks[5], v.shape, jnp.float32) * 0.01
              for k, v in online.items() if not k.startswith("pred")}
    # SiameseNetwork.__init__ calls momentum_update(0) -> target := online copy
    target = momentum_update(online, target, 0.0)
    return online, target


# --------------------------------------------------------------------------
if __name__ == "__main__":
    key = jax.random.PRNGKey(0)
    k_params, k_x1, k_x2 = jax.random.split(key, 3)

    # small shapes: batch=2, in-channels=4, spatial=16x16
    low_dim, hidden_dim, width, cin = 16, 32, 8, 4
    CLS = True

    online_params, target_params = init_params(
        k_params, cin, width, hidden_dim, low_dim)

    x1 = jax.random.normal(k_x1, (2, cin, 16, 16), jnp.float32)
    x2 = jax.random.normal(k_x2, (2, cin, 16, 16), jnp.float32)
    inps = [x1, x2]

    out = siamese_forward(online_params, target_params, inps, CLS=CLS)
    out = jax.tree_util.tree_map(jax.block_until_ready, out)

    expected_keys = ["online1", "online2", "target1", "target2", "gp_feat"]
    assert list(out.keys()) == expected_keys, list(out.keys())
    assert out["online1"].shape == (2, low_dim)
    assert out["online2"].shape == (2, low_dim)
    assert out["target1"].shape == (2, low_dim)
    assert out["gp_feat"].shape == (2, width)

    print("KERNEL_OK")
</pallas_src>

<mosaic_0001>
module attributes {stable_mosaic.version = 11 : i64} {
  func.func @_conv_gap_kernel(%arg0: i32, %arg1: memref<1x342x4xbf16, #tpu.memory_space<vmem>>, %arg2: memref<36x8xbf16, #tpu.memory_space<vmem>>, %arg3: memref<1x8xf32, #tpu.memory_space<vmem>>, %arg4: memref<288x1xf32, #tpu.memory_space<vmem>>, %arg5: memref<1x1x8xf32, #tpu.memory_space<vmem>>) attributes {dimension_semantics = [#tpu.dimension_semantics<parallel>], iteration_bounds = array<i64: 4>, scalar_prefetch = 0 : i64, scratch_operands = 0 : i64, tpu.core_type = #tpu.core_type<tc>, window_params = [{transform_indices = @transform_0, window_bounds = array<i64: 1, 342, 4>}, {pipeline_mode = #tpu.pipeline_mode<synchronous>, transform_indices = @transform_1, window_bounds = array<i64: 36, 8>}, {pipeline_mode = #tpu.pipeline_mode<synchronous>, transform_indices = @transform_2, window_bounds = array<i64: 1, 8>}, {pipeline_mode = #tpu.pipeline_mode<synchronous>, transform_indices = @transform_3, window_bounds = array<i64: 288, 1>}, {transform_indices = @transform_4, window_bounds = array<i64: 1, 1, 8>}]} {
    %c0 = arith.constant 0 : index
    %c0_0 = arith.constant 0 : index
    %c0_1 = arith.constant 0 : index
    %0 = vector.load %arg1[%c0, %c0_0, %c0_1] : memref<1x342x4xbf16, #tpu.memory_space<vmem>>, vector<1x342x4xbf16>
    %1 = vector.shape_cast %0 : vector<1x342x4xbf16> to vector<342x4xbf16>
    %2 = vector.extract_strided_slice %1 {offsets = [0, 0], sizes = [288, 4], strides = [1, 1]} : vector<342x4xbf16> to vector<288x4xbf16>
    %3 = vector.extract_strided_slice %1 {offsets = [1, 0], sizes = [288, 4], strides = [1, 1]} : vector<342x4xbf16> to vector<288x4xbf16>
    %4 = vector.extract_strided_slice %1 {offsets = [2, 0], sizes = [288, 4], strides = [1, 1]} : vector<342x4xbf16> to vector<288x4xbf16>
    %5 = vector.extract_strided_slice %1 {offsets = [18, 0], sizes = [288, 4], strides = [1, 1]} : vector<342x4xbf16> to vector<288x4xbf16>
    %6 = vector.extract_strided_slice %1 {offsets = [19, 0], sizes = [288, 4], strides = [1, 1]} : vector<342x4xbf16> to vector<288x4xbf16>
    %7 = vector.extract_strided_slice %1 {offsets = [20, 0], sizes = [288, 4], strides = [1, 1]} : vector<342x4xbf16> to vector<288x4xbf16>
    %8 = vector.extract_strided_slice %1 {offsets = [36, 0], sizes = [288, 4], strides = [1, 1]} : vector<342x4xbf16> to vector<288x4xbf16>
    %9 = vector.extract_strided_slice %1 {offsets = [37, 0], sizes = [288, 4], strides = [1, 1]} : vector<342x4xbf16> to vector<288x4xbf16>
    %10 = vector.extract_strided_slice %1 {offsets = [38, 0], sizes = [288, 4], strides = [1, 1]} : vector<342x4xbf16> to vector<288x4xbf16>
    %11 = tpu.concatenate %2, %3, %4, %5, %6, %7, %8, %9, %10 in 1 : vector<288x4xbf16>, vector<288x4xbf16>, vector<288x4xbf16>, vector<288x4xbf16>, vector<288x4xbf16>, vector<288x4xbf16>, vector<288x4xbf16>, vector<288x4xbf16>, vector<288x4xbf16> -> vector<288x36xbf16>
    %c0_2 = arith.constant 0 : index
    %c0_3 = arith.constant 0 : index
    %12 = vector.load %arg2[%c0_2, %c0_3] : memref<36x8xbf16, #tpu.memory_space<vmem>>, vector<36x8xbf16>
    %cst = arith.constant dense<0.000000e+00> : vector<288x8xf32>
    %13 = tpu.matmul %11, %12, %cst {dimension_numbers = #tpu.dot_dimension_numbers<[1], [0], [0], [1], [0, 0, 1, 1], [], []>} : vector<288x36xbf16>, vector<36x8xbf16>, vector<288x8xf32> -> vector<288x8xf32>
    %c0_4 = arith.constant 0 : index
    %c0_5 = arith.constant 0 : index
    %14 = vector.load %arg3[%c0_4, %c0_5] : memref<1x8xf32, #tpu.memory_space<vmem>>, vector<1x8xf32>
    %15 = vector.broadcast %14 : vector<1x8xf32> to vector<288x8xf32>
    %16 = arith.addf %13, %15 : vector<288x8xf32>
    %cst_6 = arith.constant 0.000000e+00 : f32
    %17 = vector.broadcast %cst_6 : f32 to vector<288x8xf32>
    %18 = arith.maximumf %16, %17 : vector<288x8xf32>
    %c0_7 = arith.constant 0 : index
    %c0_8 = arith.constant 0 : index
    %19 = vector.load %arg4[%c0_7, %c0_8] : memref<288x1xf32, #tpu.memory_space<vmem>>, vector<288x1xf32>
    %20 = vector.broadcast %19 : vector<288x1xf32> to vector<288x8xf32>
    %21 = arith.mulf %18, %20 : vector<288x8xf32>
    %cst_9 = arith.constant dense<0.000000e+00> : vector<8xf32>
    %22 = vector.multi_reduction <add>, %21, %cst_9 [0] : vector<288x8xf32> to vector<8xf32>
    %23 = vector.shape_cast %22 : vector<8xf32> to vector<1x8xf32>
    %24 = vector.shape_cast %23 : vector<1x8xf32> to vector<1x1x8xf32>
    %c0_10 = arith.constant 0 : index
    %c0_11 = arith.constant 0 : index
    %c0_12 = arith.constant 0 : index
    %25 = vector.load %arg5[%c0_10, %c0_11, %c0_12] : memref<1x1x8xf32, #tpu.memory_space<vmem>>, vector<1x1x8xf32>
    tpu.vector_store %arg5[%c0_10, %c0_11, %c0_12], %24 {strides = array<i32>} : memref<1x1x8xf32, #tpu.memory_space<vmem>>, vector<1x1x8xf32>,
    return
  }
  func.func @transform_0(%arg0: i32) -> (i32, i32, i32) {
    %c0_i32 = arith.constant 0 : i32
    %c0_i32_0 = arith.constant 0 : i32
    %c0_i32_1 = arith.constant 0 : i32
    return %arg0, %c0_i32, %c0_i32_0 : i32, i32, i32
  }
  func.func @transform_1(%arg0: i32) -> (i32, i32) {
    %c0_i32 = arith.constant 0 : i32
    %c0_i32_0 = arith.constant 0 : i32
    %c0_i32_1 = arith.constant 0 : i32
    return %c0_i32, %c0_i32_0 : i32, i32
  }
  func.func @transform_2(%arg0: i32) -> (i32, i32) {
    %c0_i32 = arith.constant 0 : i32
    %c0_i32_0 = arith.constant 0 : i32
    %c0_i32_1 = arith.constant 0 : i32
    return %c0_i32, %c0_i32_0 : i32, i32
  }
  func.func @transform_3(%arg0: i32) -> (i32, i32) {
    %c0_i32 = arith.constant 0 : i32
    %c0_i32_0 = arith.constant 0 : i32
    %c0_i32_1 = arith.constant 0 : i32
    return %c0_i32, %c0_i32_0 : i32, i32
  }
  func.func @transform_4(%arg0: i32) -> (i32, i32, i32) {
    %c0_i32 = arith.constant 0 : i32
    %c0_i32_0 = arith.constant 0 : i32
    %c0_i32_1 = arith.constant 0 : i32
    return %arg0, %c0_i32, %c0_i32_0 : i32, i32, i32
  }
}

module attributes {stable_mosaic.version = 11 : i64} {
  func.func @_mlp_kernel(%arg0: i32, %arg1: memref<4x8xf32, #tpu.memory_space<vmem>>, %arg2: memref<8x32xbf16, #tpu.memory_space<vmem>>, %arg3: memref<1x32xf32, #tpu.memory_space<vmem>>, %arg4: memref<32x16xbf16, #tpu.memory_space<vmem>>, %arg5: memref<1x16xf32, #tpu.memory_space<vmem>>, %arg6: memref<16x32xbf16, #tpu.memory_space<vmem>>, %arg7: memref<1x32xf32, #tpu.memory_space<vmem>>, %arg8: memref<32x16xbf16, #tpu.memory_space<vmem>>, %arg9: memref<1x16xf32, #tpu.memory_space<vmem>>, %arg10: memref<4x16xf32, #tpu.memory_space<vmem>>) attributes {dimension_semantics = [#tpu.dimension_semantics<arbitrary>], iteration_bounds = array<i64: 1>, scalar_prefetch = 0 : i64, scratch_operands = 0 : i64, tpu.core_type = #tpu.core_type<tc>, window_params = [{pipeline_mode = #tpu.pipeline_mode<synchronous>, transform_indices = @transform_0, window_bounds = array<i64: 4, 8>}, {pipeline_mode = #tpu.pipeline_mode<synchronous>, transform_indices = @transform_1, window_bounds = array<i64: 8, 32>}, {pipeline_mode = #tpu.pipeline_mode<synchronous>, transform_indices = @transform_2, window_bounds = array<i64: 1, 32>}, {pipeline_mode = #tpu.pipeline_mode<synchronous>, transform_indices = @transform_3, window_bounds = array<i64: 32, 16>}, {pipeline_mode = #tpu.pipeline_mode<synchronous>, transform_indices = @transform_4, window_bounds = array<i64: 1, 16>}, {pipeline_mode = #tpu.pipeline_mode<synchronous>, transform_indices = @transform_5, window_bounds = array<i64: 16, 32>}, {pipeline_mode = #tpu.pipeline_mode<synchronous>, transform_indices = @transform_6, window_bounds = array<i64: 1, 32>}, {pipeline_mode = #tpu.pipeline_mode<synchronous>, transform_indices = @transform_7, window_bounds = array<i64: 32, 16>}, {pipeline_mode = #tpu.pipeline_mode<synchronous>, transform_indices = @transform_8, window_bounds = array<i64: 1, 16>}, {pipeline_mode = #tpu.pipeline_mode<synchronous>, transform_indices = @transform_9, window_bounds = array<i64: 4, 16>}]} {
    %c0 = arith.constant 0 : index
    %c0_0 = arith.constant 0 : index
    %0 = vector.load %arg1[%c0, %c0_0] : memref<4x8xf32, #tpu.memory_space<vmem>>, vector<4x8xf32>
    %1 = arith.truncf %0 : vector<4x8xf32> to vector<4x8xbf16>
    %c0_1 = arith.constant 0 : index
    %c0_2 = arith.constant 0 : index
    %2 = vector.load %arg2[%c0_1, %c0_2] : memref<8x32xbf16, #tpu.memory_space<vmem>>, vector<8x32xbf16>
    %cst = arith.constant dense<0.000000e+00> : vector<4x32xf32>
    %3 = tpu.matmul %1, %2, %cst {dimension_numbers = #tpu.dot_dimension_numbers<[1], [0], [0], [1], [0, 0, 1, 1], [], []>} : vector<4x8xbf16>, vector<8x32xbf16>, vector<4x32xf32> -> vector<4x32xf32>
    %c0_3 = arith.constant 0 : index
    %c0_4 = arith.constant 0 : index
    %4 = vector.load %arg3[%c0_3, %c0_4] : memref<1x32xf32, #tpu.memory_space<vmem>>, vector<1x32xf32>
    %5 = vector.broadcast %4 : vector<1x32xf32> to vector<4x32xf32>
    %6 = arith.addf %3, %5 : vector<4x32xf32>
    %cst_5 = arith.constant 0.000000e+00 : f32
    %7 = vector.broadcast %cst_5 : f32 to vector<4x32xf32>
    %8 = arith.maximumf %6, %7 : vector<4x32xf32>
    %9 = arith.truncf %8 : vector<4x32xf32> to vector<4x32xbf16>
    %c0_6 = arith.constant 0 : index
    %c0_7 = arith.constant 0 : index
    %10 = vector.load %arg4[%c0_6, %c0_7] : memref<32x16xbf16, #tpu.memory_space<vmem>>, vector<32x16xbf16>
    %cst_8 = arith.constant dense<0.000000e+00> : vector<4x16xf32>
    %11 = tpu.matmul %9, %10, %cst_8 {dimension_numbers = #tpu.dot_dimension_numbers<[1], [0], [0], [1], [0, 0, 1, 1], [], []>} : vector<4x32xbf16>, vector<32x16xbf16>, vector<4x16xf32> -> vector<4x16xf32>
    %c0_9 = arith.constant 0 : index
    %c0_10 = arith.constant 0 : index
    %12 = vector.load %arg5[%c0_9, %c0_10] : memref<1x16xf32, #tpu.memory_space<vmem>>, vector<1x16xf32>
    %13 = vector.broadcast %12 : vector<1x16xf32> to vector<4x16xf32>
    %14 = arith.addf %11, %13 : vector<4x16xf32>
    %15 = arith.truncf %14 : vector<4x16xf32> to vector<4x16xbf16>
    %c0_11 = arith.constant 0 : index
    %c0_12 = arith.constant 0 : index
    %16 = vector.load %arg6[%c0_11, %c0_12] : memref<16x32xbf16, #tpu.memory_space<vmem>>, vector<16x32xbf16>
    %cst_13 = arith.constant dense<0.000000e+00> : vector<4x32xf32>
    %17 = tpu.matmul %15, %16, %cst_13 {dimension_numbers = #tpu.dot_dimension_numbers<[1], [0], [0], [1], [0, 0, 1, 1], [], []>} : vector<4x16xbf16>, vector<16x32xbf16>, vector<4x32xf32> -> vector<4x32xf32>
    %c0_14 = arith.constant 0 : index
    %c0_15 = arith.constant 0 : index
    %18 = vector.load %arg7[%c0_14, %c0_15] : memref<1x32xf32, #tpu.memory_space<vmem>>, vector<1x32xf32>
    %19 = vector.broadcast %18 : vector<1x32xf32> to vector<4x32xf32>
    %20 = arith.addf %17, %19 : vector<4x32xf32>
    %cst_16 = arith.constant 0.000000e+00 : f32
    %21 = vector.broadcast %cst_16 : f32 to vector<4x32xf32>
    %22 = arith.maximumf %20, %21 : vector<4x32xf32>
    %23 = arith.truncf %22 : vector<4x32xf32> to vector<4x32xbf16>
    %c0_17 = arith.constant 0 : index
    %c0_18 = arith.constant 0 : index
    %24 = vector.load %arg8[%c0_17, %c0_18] : memref<32x16xbf16, #tpu.memory_space<vmem>>, vector<32x16xbf16>
    %cst_19 = arith.constant dense<0.000000e+00> : vector<4x16xf32>
    %25 = tpu.matmul %23, %24, %cst_19 {dimension_numbers = #tpu.dot_dimension_numbers<[1], [0], [0], [1], [0, 0, 1, 1], [], []>} : vector<4x32xbf16>, vector<32x16xbf16>, vector<4x16xf32> -> vector<4x16xf32>
    %c0_20 = arith.constant 0 : index
    %c0_21 = arith.constant 0 : index
    %26 = vector.load %arg9[%c0_20, %c0_21] : memref<1x16xf32, #tpu.memory_space<vmem>>, vector<1x16xf32>
    %27 = vector.broadcast %26 : vector<1x16xf32> to vector<4x16xf32>
    %28 = arith.addf %25, %27 : vector<4x16xf32>
    %c0_22 = arith.constant 0 : index
    %c0_23 = arith.constant 0 : index
    %29 = vector.load %arg10[%c0_22, %c0_23] : memref<4x16xf32, #tpu.memory_space<vmem>>, vector<4x16xf32>
    tpu.vector_store %arg10[%c0_22, %c0_23], %28 {strides = array<i32>} : memref<4x16xf32, #tpu.memory_space<vmem>>, vector<4x16xf32>,
    return
  }
  func.func @transform_0(%arg0: i32) -> (i32, i32) {
    %c0_i32 = arith.constant 0 : i32
    %c0_i32_0 = arith.constant 0 : i32
    %c0_i32_1 = arith.constant 0 : i32
    return %c0_i32, %c0_i32_0 : i32, i32
  }
  func.func @transform_1(%arg0: i32) -> (i32, i32) {
    %c0_i32 = arith.constant 0 : i32
    %c0_i32_0 = arith.constant 0 : i32
    %c0_i32_1 = arith.constant 0 : i32
    return %c0_i32, %c0_i32_0 : i32, i32
  }
  func.func @transform_2(%arg0: i32) -> (i32, i32) {
    %c0_i32 = arith.constant 0 : i32
    %c0_i32_0 = arith.constant 0 : i32
    %c0_i32_1 = arith.constant 0 : i32
    return %c0_i32, %c0_i32_0 : i32, i32
  }
  func.func @transform_3(%arg0: i32) -> (i32, i32) {
    %c0_i32 = arith.constant 0 : i32
    %c0_i32_0 = arith.constant 0 : i32
    %c0_i32_1 = arith.constant 0 : i32
    return %c0_i32, %c0_i32_0 : i32, i32
  }
  func.func @transform_4(%arg0: i32) -> (i32, i32) {
    %c0_i32 = arith.constant 0 : i32
    %c0_i32_0 = arith.constant 0 : i32
    %c0_i32_1 = arith.constant 0 : i32
    return %c0_i32, %c0_i32_0 : i32, i32
  }
  func.func @transform_5(%arg0: i32) -> (i32, i32) {
    %c0_i32 = arith.constant 0 : i32
    %c0_i32_0 = arith.constant 0 : i32
    %c0_i32_1 = arith.constant 0 : i32
    return %c0_i32, %c0_i32_0 : i32, i32
  }
  func.func @transform_6(%arg0: i32) -> (i32, i32) {
    %c0_i32 = arith.constant 0 : i32
    %c0_i32_0 = arith.constant 0 : i32
    %c0_i32_1 = arith.constant 0 : i32
    return %c0_i32, %c0_i32_0 : i32, i32
  }
  func.func @transform_7(%arg0: i32) -> (i32, i32) {
    %c0_i32 = arith.constant 0 : i32
    %c0_i32_0 = arith.constant 0 : i32
    %c0_i32_1 = arith.constant 0 : i32
    return %c0_i32, %c0_i32_0 : i32, i32
  }
  func.func @transform_8(%arg0: i32) -> (i32, i32) {
    %c0_i32 = arith.constant 0 : i32
    %c0_i32_0 = arith.constant 0 : i32
    %c0_i32_1 = arith.constant 0 : i32
    return %c0_i32, %c0_i32_0 : i32, i32
  }
  func.func @transform_9(%arg0: i32) -> (i32, i32) {
    %c0_i32 = arith.constant 0 : i32
    %c0_i32_0 = arith.constant 0 : i32
    %c0_i32_1 = arith.constant 0 : i32
    return %c0_i32, %c0_i32_0 : i32, i32
  }
}

module attributes {stable_mosaic.version = 11 : i64} {
  func.func @_mlp_kernel(%arg0: i32, %arg1: memref<4x8xf32, #tpu.memory_space<vmem>>, %arg2: memref<8x32xbf16, #tpu.memory_space<vmem>>, %arg3: memref<1x32xf32, #tpu.memory_space<vmem>>, %arg4: memref<32x16xbf16, #tpu.memory_space<vmem>>, %arg5: memref<1x16xf32, #tpu.memory_space<vmem>>, %arg6: memref<4x16xf32, #tpu.memory_space<vmem>>) attributes {dimension_semantics = [#tpu.dimension_semantics<arbitrary>], iteration_bounds = array<i64: 1>, scalar_prefetch = 0 : i64, scratch_operands = 0 : i64, tpu.core_type = #tpu.core_type<tc>, window_params = [{pipeline_mode = #tpu.pipeline_mode<synchronous>, transform_indices = @transform_0, window_bounds = array<i64: 4, 8>}, {pipeline_mode = #tpu.pipeline_mode<synchronous>, transform_indices = @transform_1, window_bounds = array<i64: 8, 32>}, {pipeline_mode = #tpu.pipeline_mode<synchronous>, transform_indices = @transform_2, window_bounds = array<i64: 1, 32>}, {pipeline_mode = #tpu.pipeline_mode<synchronous>, transform_indices = @transform_3, window_bounds = array<i64: 32, 16>}, {pipeline_mode = #tpu.pipeline_mode<synchronous>, transform_indices = @transform_4, window_bounds = array<i64: 1, 16>}, {pipeline_mode = #tpu.pipeline_mode<synchronous>, transform_indices = @transform_5, window_bounds = array<i64: 4, 16>}]} {
    %c0 = arith.constant 0 : index
    %c0_0 = arith.constant 0 : index
    %0 = vector.load %arg1[%c0, %c0_0] : memref<4x8xf32, #tpu.memory_space<vmem>>, vector<4x8xf32>
    %1 = arith.truncf %0 : vector<4x8xf32> to vector<4x8xbf16>
    %c0_1 = arith.constant 0 : index
    %c0_2 = arith.constant 0 : index
    %2 = vector.load %arg2[%c0_1, %c0_2] : memref<8x32xbf16, #tpu.memory_space<vmem>>, vector<8x32xbf16>
    %cst = arith.constant dense<0.000000e+00> : vector<4x32xf32>
    %3 = tpu.matmul %1, %2, %cst {dimension_numbers = #tpu.dot_dimension_numbers<[1], [0], [0], [1], [0, 0, 1, 1], [], []>} : vector<4x8xbf16>, vector<8x32xbf16>, vector<4x32xf32> -> vector<4x32xf32>
    %c0_3 = arith.constant 0 : index
    %c0_4 = arith.constant 0 : index
    %4 = vector.load %arg3[%c0_3, %c0_4] : memref<1x32xf32, #tpu.memory_space<vmem>>, vector<1x32xf32>
    %5 = vector.broadcast %4 : vector<1x32xf32> to vector<4x32xf32>
    %6 = arith.addf %3, %5 : vector<4x32xf32>
    %cst_5 = arith.constant 0.000000e+00 : f32
    %7 = vector.broadcast %cst_5 : f32 to vector<4x32xf32>
    %8 = arith.maximumf %6, %7 : vector<4x32xf32>
    %9 = arith.truncf %8 : vector<4x32xf32> to vector<4x32xbf16>
    %c0_6 = arith.constant 0 : index
    %c0_7 = arith.constant 0 : index
    %10 = vector.load %arg4[%c0_6, %c0_7] : memref<32x16xbf16, #tpu.memory_space<vmem>>, vector<32x16xbf16>
    %cst_8 = arith.constant dense<0.000000e+00> : vector<4x16xf32>
    %11 = tpu.matmul %9, %10, %cst_8 {dimension_numbers = #tpu.dot_dimension_numbers<[1], [0], [0], [1], [0, 0, 1, 1], [], []>} : vector<4x32xbf16>, vector<32x16xbf16>, vector<4x16xf32> -> vector<4x16xf32>
    %c0_9 = arith.constant 0 : index
    %c0_10 = arith.constant 0 : index
    %12 = vector.load %arg5[%c0_9, %c0_10] : memref<1x16xf32, #tpu.memory_space<vmem>>, vector<1x16xf32>
    %13 = vector.broadcast %12 : vector<1x16xf32> to vector<4x16xf32>
    %14 = arith.addf %11, %13 : vector<4x16xf32>
    %c0_11 = arith.constant 0 : index
    %c0_12 = arith.constant 0 : index
    %15 = vector.load %arg6[%c0_11, %c0_12] : memref<4x16xf32, #tpu.memory_space<vmem>>, vector<4x16xf32>
    tpu.vector_store %arg6[%c0_11, %c0_12], %14 {strides = array<i32>} : memref<4x16xf32, #tpu.memory_space<vmem>>, vector<4x16xf32>,
    return
  }
  func.func @transform_0(%arg0: i32) -> (i32, i32) {
    %c0_i32 = arith.constant 0 : i32
    %c0_i32_0 = arith.constant 0 : i32
    %c0_i32_1 = arith.constant 0 : i32
    return %c0_i32, %c0_i32_0 : i32, i32
  }
  func.func @transform_1(%arg0: i32) -> (i32, i32) {
    %c0_i32 = arith.constant 0 : i32
    %c0_i32_0 = arith.constant 0 : i32
    %c0_i32_1 = arith.constant 0 : i32
    return %c0_i32, %c0_i32_0 : i32, i32
  }
  func.func @transform_2(%arg0: i32) -> (i32, i32) {
    %c0_i32 = arith.constant 0 : i32
    %c0_i32_0 = arith.constant 0 : i32
    %c0_i32_1 = arith.constant 0 : i32
    return %c0_i32, %c0_i32_0 : i32, i32
  }
  func.func @transform_3(%arg0: i32) -> (i32, i32) {
    %c0_i32 = arith.constant 0 : i32
    %c0_i32_0 = arith.constant 0 : i32
    %c0_i32_1 = arith.constant 0 : i32
    return %c0_i32, %c0_i32_0 : i32, i32
  }
  func.func @transform_4(%arg0: i32) -> (i32, i32) {
    %c0_i32 = arith.constant 0 : i32
    %c0_i32_0 = arith.constant 0 : i32
    %c0_i32_1 = arith.constant 0 : i32
    return %c0_i32, %c0_i32_0 : i32, i32
  }
  func.func @transform_5(%arg0: i32) -> (i32, i32) {
    %c0_i32 = arith.constant 0 : i32
    %c0_i32_0 = arith.constant 0 : i32
    %c0_i32_1 = arith.constant 0 : i32
    return %c0_i32, %c0_i32_0 : i32, i32
  }
}

</mosaic_0001>

<llo_original>
// kernel: _siamese_core.7
$region0: #{_siamese_core.7}
  #allocation0 [shape = 'u32[]', space=smem, size = 0x4, offset = 0x4, fixed_abs, tag = 'smem constant byte address 0x4 - core index']
  #allocation1 [shape = 'u32[144,128]{1,0:T(1,128)}', space=vmem, size = 0x12000, scoped, tag = 'internal scratch']
  %s0 = inlined_call_operand.vmem [shape: f32[4,8], index: 0, kind: input, shape index: {}]
  %s1 = inlined_call_operand.vmem [shape: bf16[8,32], index: 1, kind: input, shape index: {}]
  %s2 = inlined_call_operand.vmem [shape: f32[1,32], index: 2, kind: input, shape index: {}]
  %s3 = inlined_call_operand.vmem [shape: bf16[32,16], index: 3, kind: input, shape index: {}]
  %s4 = inlined_call_operand.vmem [shape: f32[1,16], index: 4, kind: input, shape index: {}]
  %s5 = inlined_call_operand.hbm [shape: f32[4,16], index: 5, kind: output, shape index: {}]
  %s6 = sld [smem:[#allocation0]]
  $region30: #{_siamese_core.7} parent=0
    _
  %s8 = ssub.s32 1, %s6
  %s9 = scalar_select 0, %s8, %s6
  $region1: #{_siamese_core.7} parent=0
    #allocation2 [shape = 'u8[2048]{0}', space=vmem, size = 0x800, scoped, tag = 'output window, operand 0, single buffered']
    #allocation3 [shape = 's32[1]{0}', space=sflag, size = 0x4, scoped, tag = 'scoped memory for _siamese_core.7']
    %10 = vsyncpa [#allocation3], 0
    // Predicated region
    $region2: #{_siamese_core.7} parent=1 // pred_check
      _
    $region3: #{_siamese_core.7} parent=1 // pred_check_branch
      %12 = sbr.rel (0) target = $region5
    $region4: #{_siamese_core.7} parent=1 // pred_region
      _
    $region5: #{_siamese_core.7} parent=1 // pred_fallthru
      _
    // Predicated region
    $region6: #{_siamese_core.7} parent=1 // pred_check
      _
    $region7: #{_siamese_core.7} parent=1 // pred_check_branch
      %14 = sbr.rel (0) target = $region9
    $region8: #{_siamese_core.7} parent=1 // pred_region
      _
    $region9: #{_siamese_core.7} parent=1 // pred_fallthru
      _
    // Predicated region
    $region10: #{_siamese_core.7} parent=1 // pred_check
      _
    $region11: #{_siamese_core.7} parent=1 // pred_check_branch
      %16 = sbr.rel (0) target = $region13
    $region12: #{_siamese_core.7} parent=1 // pred_region
      _
    $region13: #{_siamese_core.7} parent=1 // pred_fallthru
      _
    // Predicated region
    $region14: #{_siamese_core.7} parent=1 // pred_check
      _
    $region15: #{_siamese_core.7} parent=1 // pred_check_branch
      %18 = sbr.rel (0) target = $region17
    $region16: #{_siamese_core.7} parent=1 // pred_region
      _
    $region17: #{_siamese_core.7} parent=1 // pred_fallthru
      _
    // Predicated region
    $region18: #{_siamese_core.7} parent=1 // pred_check
      _
    $region19: #{_siamese_core.7} parent=1 // pred_check_branch
      %20 = sbr.rel (0) target = $region21
    $region20: #{_siamese_core.7} parent=1 // pred_region
      _
    $region21: #{_siamese_core.7} parent=1 // pred_fallthru
      _
    %v22 = vld [vmem:[%s0] sm:$0xf]
    %v23 = vpack.c.bf16 %v22, %v22
    %v24 = vld [vmem:[%s1] sm:$0xf]
    %v25 = vld [vmem:[%s2] sm:$0x1]
    %v27 = vlaneseq
    %v28 = vshrl.u32 %v27, 7
    %v29 = vsub.s32 0, %v28
    %v30 = vrot.slane %v25, %v29
    %vm32 = vcmask 64512
    %v34 = vsel %vm32, %v23, 0
    %vm36 = vcmask 1043456
    %v38 = vsel %vm36, %v24, 0
    %40 = vmatprep.subr.bf16.mxu0 0
    %41 = vmatpush1.bf16.msra.mxu0 %v38
    %42 = vmatprep.subr.bf16.mxu0 0
    %43 = vmatpush1.bf16.msra.mxu0 0
    %44 = vmatprep.subr.bf16.mxu0 0
    %45 = vmatpush1.bf16.msra.mxu0 0
    %46 = vmatprep.subr.bf16.mxu0 0
    %47 = vmatpush1.bf16.msra.mxu0 0
    %48 = vmatprep.subr.bf16.mxu0 0
    %49 = vmatpush1.bf16.msra.mxu0 0
    %50 = vmatprep.subr.bf16.mxu0 0
    %51 = vmatpush1.bf16.msra.mxu0 0
    %52 = vmatprep.subr.bf16.mxu0 0
    %53 = vmatpush1.bf16.msra.mxu0 0
    %54 = vmatprep.subr.bf16.mxu0 0
    %55 = vmatpush1.bf16.msra.mxu0 0
    %56 = vmatprep.subr.bf16.mxu0 0
    %57 = vmatpush1.bf16.msra.mxu0 0
    %58 = vmatprep.subr.bf16.mxu0 0
    %59 = vmatpush1.bf16.msra.mxu0 0
    %60 = vmatprep.subr.bf16.mxu0 0
    %61 = vmatpush1.bf16.msra.mxu0 0
    %62 = vmatprep.subr.bf16.mxu0 0
    %63 = vmatpush1.bf16.msra.mxu0 0
    %64 = vmatprep.subr.bf16.mxu0 0
    %65 = vmatpush1.bf16.msra.mxu0 0
    %66 = vmatprep.subr.bf16.mxu0 0
    %67 = vmatpush1.bf16.msra.mxu0 0
    %68 = vmatprep.subr.bf16.mxu0 0
    %69 = vmatpush1.bf16.msra.mxu0 0
    %70 = vmatprep.subr.bf16.mxu0 0
    %71 = vmatpush1.bf16.msra.mxu0 0
    %72 = vmatprep.mubr.bf16.mxu0 0
    %73 = vmatmul.mubr.bf16.gmra.mrb[0].mxu0 %v34
    %v74 = vpop.f32.mrb[0].mxu0
    %v75 = vadd.f32 %v30, %v74
    %v76 = vpop.f32.mrb[0].mxu0
    %v77 = vpop.f32.mrb[0].mxu0
    %v78 = vpop.f32.mrb[0].mxu0
    %79 = vdwg.mxu0
    %v80 = vmax.f32 %v75, 0.0
    %v81 = vpack.c.bf16 %v80, %v80
    %v82 = vld [vmem:[%s3] sm:$0xf]
    %v83 = vld [vmem:[%s3 + $0x4] sm:$0xf]
    %v84 = vld [vmem:[%s3 + $0x8] sm:$0xf]
    %v85 = vld [vmem:[%s3 + $0xc] sm:$0xf]
    %v86 = vld [vmem:[%s4] sm:$0x1]
    %v88 = vlaneseq
    %v89 = vshrl.u32 %v88, 7
    %v90 = vsub.s32 0, %v89
    %v91 = vrot.slane %v86, %v90
    %v97 = vunpack.c.l.b16 %v82
    %v98 = vunpack.c.l.b16 %v83
    %v99 = vunpack.c.l.b16 %v84
    %v100 = vunpack.c.l.b16 %v85
    %v101 = vpack.c.b16 %v98, %v97
    %v102 = vpack.c.b16 %v100, %v99
    %vm105 = vcmask 261120
    %v107 = vsel %vm105, %v81, 0
    %109 = vmatprep.subr.bf16.mxu0 0
    %110 = vmatpush1.bf16.msra.mxu0 %v101
    %111 = vmatprep.subr.bf16.mxu0 0
    %112 = vmatpush1.bf16.msra.mxu0 %v102
    %113 = vmatprep.subr.bf16.mxu0 0
    %114 = vmatpush1.bf16.msra.mxu0 0
    %115 = vmatprep.subr.bf16.mxu0 0
    %116 = vmatpush1.bf16.msra.mxu0 0
    %117 = vmatprep.subr.bf16.mxu0 0
    %118 = vmatpush1.bf16.msra.mxu0 0
    %119 = vmatprep.subr.bf16.mxu0 0
    %120 = vmatpush1.bf16.msra.mxu0 0
    %121 = vmatprep.subr.bf16.mxu0 0
    %122 = vmatpush1.bf16.msra.mxu0 0
    %123 = vmatprep.subr.bf16.mxu0 0
    %124 = vmatpush1.bf16.msra.mxu0 0
    %125 = vmatprep.subr.bf16.mxu0 0
    %126 = vmatpush1.bf16.msra.mxu0 0
    %127 = vmatprep.subr.bf16.mxu0 0
    %128 = vmatpush1.bf16.msra.mxu0 0
    %129 = vmatprep.subr.bf16.mxu0 0
    %130 = vmatpush1.bf16.msra.mxu0 0
    %131 = vmatprep.subr.bf16.mxu0 0
    %132 = vmatpush1.bf16.msra.mxu0 0
    %133 = vmatprep.subr.bf16.mxu0 0
    %134 = vmatpush1.bf16.msra.mxu0 0
    %135 = vmatprep.subr.bf16.mxu0 0
    %136 = vmatpush1.bf16.msra.mxu0 0
    %137 = vmatprep.subr.bf16.mxu0 0
    %138 = vmatpush1.bf16.msra.mxu0 0
    %139 = vmatprep.subr.bf16.mxu0 0
    %140 = vmatpush1.bf16.msra.mxu0 0
    %141 = vmatprep.mubr.bf16.mxu0 0
    %142 = vmatmul.mubr.bf16.gmra.mrb[0].mxu0 %v107
    %v143 = vpop.f32.mrb[0].mxu0
    %v144 = vadd.f32 %v91, %v143
    %v145 = vpop.f32.mrb[0].mxu0
    %v146 = vpop.f32.mrb[0].mxu0
    %v147 = vpop.f32.mrb[0].mxu0
    %148 = vdwg.mxu0
    %vm149 = vcmask 125952
    %150 = vst.msk [vmem:[#allocation2] sm:$0xf] %vm149, %v144
    // Predicated region
    $region22: #{_siamese_core.7} parent=1 // pred_check
      _
    $region23: #{_siamese_core.7} parent=1 // pred_check_branch
      %152 = sbr.rel (0) target = $region25
    $region24: #{_siamese_core.7} parent=1 // pred_region
      %s154 = ssub.s32 64, 64
      %155 = vsyncadd [#allocation3], %s154
      %s157 = sshll.u32 [#allocation2], 4
      %s158 = int_to_ptr.vmem [resolvable:$true] %s157
      %160 = dma.vmem_to_hbm [thread:$0]  %s158, 64, %s5, [#allocation3]
    $region25: #{_siamese_core.7} parent=1 // pred_fallthru
      _
    // Predicated region
    $region26: #{_siamese_core.7} parent=1 // pred_check
      _
    $region27: #{_siamese_core.7} parent=1 // pred_check_branch
      %162 = sbr.rel (0) target = $region29
    $region28: #{_siamese_core.7} parent=1 // pred_region
      %163 = dma.done [#allocation3], 64
    $region29: #{_siamese_core.7} parent=1 // pred_fallthru
      _
    %164 = vsyncpa [#allocation3], 1

// kernel: _siamese_core.5
$region0: #{_siamese_core.5}
  #allocation0 [shape = 'u32[]', space=smem, size = 0x4, offset = 0x4, fixed_abs, tag = 'smem constant byte address 0x4 - core index']
  #allocation1 [shape = 'u32[144,128]{1,0:T(1,128)}', space=vmem, size = 0x12000, scoped, tag = 'internal scratch']
  %s0 = inlined_call_operand.vmem [shape: f32[4,8], index: 0, kind: input, shape index: {}]
  %s1 = inlined_call_operand.vmem [shape: bf16[8,32], index: 1, kind: input, shape index: {}]
  %s2 = inlined_call_operand.vmem [shape: f32[1,32], index: 2, kind: input, shape index: {}]
  %s3 = inlined_call_operand.vmem [shape: bf16[32,16], index: 3, kind: input, shape index: {}]
  %s4 = inlined_call_operand.vmem [shape: f32[1,16], index: 4, kind: input, shape index: {}]
  %s5 = inlined_call_operand.vmem [shape: bf16[16,32], index: 5, kind: input, shape index: {}]
  %s6 = inlined_call_operand.vmem [shape: f32[1,32], index: 6, kind: input, shape index: {}]
  %s7 = inlined_call_operand.vmem [shape: bf16[32,16], index: 7, kind: input, shape index: {}]
  %s8 = inlined_call_operand.vmem [shape: f32[1,16], index: 8, kind: input, shape index: {}]
  %s9 = inlined_call_operand.hbm [shape: f32[4,16], index: 9, kind: output, shape index: {}]
  %s10 = sld [smem:[#allocation0]]
  $region46: #{_siamese_core.5} parent=0
    _
  %s12 = ssub.s32 1, %s10
  %s13 = scalar_select 0, %s12, %s10
  $region1: #{_siamese_core.5} parent=0
    #allocation2 [shape = 'u8[2048]{0}', space=vmem, size = 0x800, scoped, tag = 'output window, operand 0, single buffered']
    #allocation3 [shape = 's32[1]{0}', space=sflag, size = 0x4, scoped, tag = 'scoped memory for _siamese_core.5']
    %14 = vsyncpa [#allocation3], 0
    // Predicated region
    $region2: #{_siamese_core.5} parent=1 // pred_check
      _
    $region3: #{_siamese_core.5} parent=1 // pred_check_branch
      %16 = sbr.rel (0) target = $region5
    $region4: #{_siamese_core.5} parent=1 // pred_region
      _
    $region5: #{_siamese_core.5} parent=1 // pred_fallthru
      _
    // Predicated region
    $region6: #{_siamese_core.5} parent=1 // pred_check
      _
    $region7: #{_siamese_core.5} parent=1 // pred_check_branch
      %18 = sbr.rel (0) target = $region9
    $region8: #{_siamese_core.5} parent=1 // pred_region
      _
    $region9: #{_siamese_core.5} parent=1 // pred_fallthru
      _
    // Predicated region
    $region10: #{_siamese_core.5} parent=1 // pred_check
      _
    $region11: #{_siamese_core.5} parent=1 // pred_check_branch
      %20 = sbr.rel (0) target = $region13
    $region12: #{_siamese_core.5} parent=1 // pred_region
      _
    $region13: #{_siamese_core.5} parent=1 // pred_fallthru
      _
    // Predicated region
    $region14: #{_siamese_core.5} parent=1 // pred_check
      _
    $region15: #{_siamese_core.5} parent=1 // pred_check_branch
      %22 = sbr.rel (0) target = $region17
    $region16: #{_siamese_core.5} parent=1 // pred_region
      _
    $region17: #{_siamese_core.5} parent=1 // pred_fallthru
      _
    // Predicated region
    $region18: #{_siamese_core.5} parent=1 // pred_check
      _
    $region19: #{_siamese_core.5} parent=1 // pred_check_branch
      %24 = sbr.rel (0) target = $region21
    $region20: #{_siamese_core.5} parent=1 // pred_region
      _
    $region21: #{_siamese_core.5} parent=1 // pred_fallthru
      _
    // Predicated region
    $region22: #{_siamese_core.5} parent=1 // pred_check
      _
    $region23: #{_siamese_core.5} parent=1 // pred_check_branch
      %26 = sbr.rel (0) target = $region25
    $region24: #{_siamese_core.5} parent=1 // pred_region
      _
    $region25: #{_siamese_core.5} parent=1 // pred_fallthru
      _
    // Predicated region
    $region26: #{_siamese_core.5} parent=1 // pred_check
      _
    $region27: #{_siamese_core.5} parent=1 // pred_check_branch
      %28 = sbr.rel (0) target = $region29
    $region28: #{_siamese_core.5} parent=1 // pred_region
      _
    $region29: #{_siamese_core.5} parent=1 // pred_fallthru
      _
    // Predicated region
    $region30: #{_siamese_core.5} parent=1 // pred_check
      _
    $region31: #{_siamese_core.5} parent=1 // pred_check_branch
      %30 = sbr.rel (0) target = $region33
    $region32: #{_siamese_core.5} parent=1 // pred_region
      _
    $region33: #{_siamese_core.5} parent=1 // pred_fallthru
      _
    // Predicated region
    $region34: #{_siamese_core.5} parent=1 // pred_check
      _
    $region35: #{_siamese_core.5} parent=1 // pred_check_branch
      %32 = sbr.rel (0) target = $region37
    $region36: #{_siamese_core.5} parent=1 // pred_region
      _
    $region37: #{_siamese_core.5} parent=1 // pred_fallthru
      _
    %v34 = vld [vmem:[%s0] sm:$0xf]
    %v35 = vpack.c.bf16 %v34, %v34
    %v36 = vld [vmem:[%s1] sm:$0xf]
    %v37 = vld [vmem:[%s2] sm:$0x1]
    %v39 = vlaneseq
    %v40 = vshrl.u32 %v39, 7
    %v41 = vsub.s32 0, %v40
    %v42 = vrot.slane %v37, %v41
    %vm44 = vcmask 64512
    %v46 = vsel %vm44, %v35, 0
    %vm48 = vcmask 1043456
    %v50 = vsel %vm48, %v36, 0
    %52 = vmatprep.subr.bf16.mxu0 0
    %53 = vmatpush1.bf16.msra.mxu0 %v50
    %54 = vmatprep.subr.bf16.mxu0 0
    %55 = vmatpush1.bf16.msra.mxu0 0
    %56 = vmatprep.subr.bf16.mxu0 0
    %57 = vmatpush1.bf16.msra.mxu0 0
    %58 = vmatprep.subr.bf16.mxu0 0
    %59 = vmatpush1.bf16.msra.mxu0 0
    %60 = vmatprep.subr.bf16.mxu0 0
    %61 = vmatpush1.bf16.msra.mxu0 0
    %62 = vmatprep.subr.bf16.mxu0 0
    %63 = vmatpush1.bf16.msra.mxu0 0
    %64 = vmatprep.subr.bf16.mxu0 0
    %65 = vmatpush1.bf16.msra.mxu0 0
    %66 = vmatprep.subr.bf16.mxu0 0
    %67 = vmatpush1.bf16.msra.mxu0 0
    %68 = vmatprep.subr.bf16.mxu0 0
    %69 = vmatpush1.bf16.msra.mxu0 0
    %70 = vmatprep.subr.bf16.mxu0 0
    %71 = vmatpush1.bf16.msra.mxu0 0
    %72 = vmatprep.subr.bf16.mxu0 0
    %73 = vmatpush1.bf16.msra.mxu0 0
    %74 = vmatprep.subr.bf16.mxu0 0
    %75 = vmatpush1.bf16.msra.mxu0 0
    %76 = vmatprep.subr.bf16.mxu0 0
    %77 = vmatpush1.bf16.msra.mxu0 0
    %78 = vmatprep.subr.bf16.mxu0 0
    %79 = vmatpush1.bf16.msra.mxu0 0
    %80 = vmatprep.subr.bf16.mxu0 0
    %81 = vmatpush1.bf16.msra.mxu0 0
    %82 = vmatprep.subr.bf16.mxu0 0
    %83 = vmatpush1.bf16.msra.mxu0 0
    %84 = vmatprep.mubr.bf16.mxu0 0
    %85 = vmatmul.mubr.bf16.gmra.mrb[0].mxu0 %v46
    %v86 = vpop.f32.mrb[0].mxu0
    %v87 = vadd.f32 %v42, %v86
    %v88 = vpop.f32.mrb[0].mxu0
    %v89 = vpop.f32.mrb[0].mxu0
    %v90 = vpop.f32.mrb[0].mxu0
    %91 = vdwg.mxu0
    %v92 = vmax.f32 %v87, 0.0
    %v93 = vpack.c.bf16 %v92, %v92
    %v94 = vld [vmem:[%s3] sm:$0xf]
    %v95 = vld [vmem:[%s3 + $0x4] sm:$0xf]
    %v96 = vld [vmem:[%s3 + $0x8] sm:$0xf]
    %v97 = vld [vmem:[%s3 + $0xc] sm:$0xf]
    %v98 = vld [vmem:[%s4] sm:$0x1]
    %v100 = vlaneseq
    %v101 = vshrl.u32 %v100, 7
    %v102 = vsub.s32 0, %v101
    %v103 = vrot.slane %v98, %v102
    %v109 = vunpack.c.l.b16 %v94
    %v110 = vunpack.c.l.b16 %v95
    %v111 = vunpack.c.l.b16 %v96
    %v112 = vunpack.c.l.b16 %v97
    %v113 = vpack.c.b16 %v110, %v109
    %v114 = vpack.c.b16 %v112, %v111
    %vm117 = vcmask 261120
    %v119 = vsel %vm117, %v93, 0
    %121 = vmatprep.subr.bf16.mxu0 0
    %122 = vmatpush1.bf16.msra.mxu0 %v113
    %123 = vmatprep.subr.bf16.mxu0 0
    %124 = vmatpush1.bf16.msra.mxu0 %v114
    %125 = vmatprep.subr.bf16.mxu0 0
    %126 = vmatpush1.bf16.msra.mxu0 0
    %127 = vmatprep.subr.bf16.mxu0 0
    %128 = vmatpush1.bf16.msra.mxu0 0
    %129 = vmatprep.subr.bf16.mxu0 0
    %130 = vmatpush1.bf16.msra.mxu0 0
    %131 = vmatprep.subr.bf16.mxu0 0
    %132 = vmatpush1.bf16.msra.mxu0 0
    %133 = vmatprep.subr.bf16.mxu0 0
    %134 = vmatpush1.bf16.msra.mxu0 0
    %135 = vmatprep.subr.bf16.mxu0 0
    %136 = vmatpush1.bf16.msra.mxu0 0
    %137 = vmatprep.subr.bf16.mxu0 0
    %138 = vmatpush1.bf16.msra.mxu0 0
    %139 = vmatprep.subr.bf16.mxu0 0
    %140 = vmatpush1.bf16.msra.mxu0 0
    %141 = vmatprep.subr.bf16.mxu0 0
    %142 = vmatpush1.bf16.msra.mxu0 0
    %143 = vmatprep.subr.bf16.mxu0 0
    %144 = vmatpush1.bf16.msra.mxu0 0
    %145 = vmatprep.subr.bf16.mxu0 0
    %146 = vmatpush1.bf16.msra.mxu0 0
    %147 = vmatprep.subr.bf16.mxu0 0
    %148 = vmatpush1.bf16.msra.mxu0 0
    %149 = vmatprep.subr.bf16.mxu0 0
    %150 = vmatpush1.bf16.msra.mxu0 0
    %151 = vmatprep.subr.bf16.mxu0 0
    %152 = vmatpush1.bf16.msra.mxu0 0
    %153 = vmatprep.mubr.bf16.mxu0 0
    %154 = vmatmul.mubr.bf16.gmra.mrb[0].mxu0 %v119
    %v155 = vpop.f32.mrb[0].mxu0
    %v156 = vadd.f32 %v103, %v155
    %v157 = vpop.f32.mrb[0].mxu0
    %v158 = vpop.f32.mrb[0].mxu0
    %v159 = vpop.f32.mrb[0].mxu0
    %160 = vdwg.mxu0
    %v161 = vpack.c.bf16 %v156, %v156
    %v162 = vld [vmem:[%s5] sm:$0xf]
    %v163 = vld [vmem:[%s5 + $0x4] sm:$0xf]
    %v164 = vld [vmem:[%s6] sm:$0x1]
    %v166 = vlaneseq
    %v167 = vshrl.u32 %v166, 7
    %v168 = vsub.s32 0, %v167
    %v169 = vrot.slane %v164, %v168
    %v173 = vunpack.c.l.b16 %v162
    %v174 = vunpack.c.l.b16 %v163
    %v175 = vpack.c.b16 %v174, %v173
    %vm177 = vcmask 130048
    %v179 = vsel %vm177, %v161, 0
    %181 = vmatprep.subr.bf16.mxu0 0
    %182 = vmatpush1.bf16.msra.mxu0 %v175
    %183 = vmatprep.subr.bf16.mxu0 0
    %184 = vmatpush1.bf16.msra.mxu0 0
    %185 = vmatprep.subr.bf16.mxu0 0
    %186 = vmatpush1.bf16.msra.mxu0 0
    %187 = vmatprep.subr.bf16.mxu0 0
    %188 = vmatpush1.bf16.msra.mxu0 0
    %189 = vmatprep.subr.bf16.mxu0 0
    %190 = vmatpush1.bf16.msra.mxu0 0
    %191 = vmatprep.subr.bf16.mxu0 0
    %192 = vmatpush1.bf16.msra.mxu0 0
    %193 = vmatprep.subr.bf16.mxu0 0
    %194 = vmatpush1.bf16.msra.mxu0 0
    %195 = vmatprep.subr.bf16.mxu0 0
    %196 = vmatpush1.bf16.msra.mxu0 0
    %197 = vmatprep.subr.bf16.mxu0 0
    %198 = vmatpush1.bf16.msra.mxu0 0
    %199 = vmatprep.subr.bf16.mxu0 0
    %200 = vmatpush1.bf16.msra.mxu0 0
    %201 = vmatprep.subr.bf16.mxu0 0
    %202 = vmatpush1.bf16.msra.mxu0 0
    %203 = vmatprep.subr.bf16.mxu0 0
    %204 = vmatpush1.bf16.msra.mxu0 0
    %205 = vmatprep.subr.bf16.mxu0 0
    %206 = vmatpush1.bf16.msra.mxu0 0
    %207 = vmatprep.subr.bf16.mxu0 0
    %208 = vmatpush1.bf16.msra.mxu0 0
    %209 = vmatprep.subr.bf16.mxu0 0
    %210 = vmatpush1.bf16.msra.mxu0 0
    %211 = vmatprep.subr.bf16.mxu0 0
    %212 = vmatpush1.bf16.msra.mxu0 0
    %213 = vmatprep.mubr.bf16.mxu0 0
    %214 = vmatmul.mubr.bf16.gmra.mrb[0].mxu0 %v179
    %v215 = vpop.f32.mrb[0].mxu0
    %v216 = vadd.f32 %v169, %v215
    %v217 = vpop.f32.mrb[0].mxu0
    %v218 = vpop.f32.mrb[0].mxu0
    %v219 = vpop.f32.mrb[0].mxu0
    %220 = vdwg.mxu0
    %v221 = vmax.f32 %v216, 0.0
    %v222 = vpack.c.bf16 %v221, %v221
    %v223 = vld [vmem:[%s7] sm:$0xf]
    %v224 = vld [vmem:[%s7 + $0x4] sm:$0xf]
    %v225 = vld [vmem:[%s7 + $0x8] sm:$0xf]
    %v226 = vld [vmem:[%s7 + $0xc] sm:$0xf]
    %v227 = vld [vmem:[%s8] sm:$0x1]
    %v229 = vlaneseq
    %v230 = vshrl.u32 %v229, 7
    %v231 = vsub.s32 0, %v230
    %v232 = vrot.slane %v227, %v231
    %v238 = vunpack.c.l.b16 %v223
    %v239 = vunpack.c.l.b16 %v224
    %v240 = vunpack.c.l.b16 %v225
    %v241 = vunpack.c.l.b16 %v226
    %v242 = vpack.c.b16 %v239, %v238
    %v243 = vpack.c.b16 %v241, %v240
    %v247 = vsel %vm117, %v222, 0
    %249 = vmatprep.subr.bf16.mxu0 0
    %250 = vmatpush1.bf16.msra.mxu0 %v242
    %251 = vmatprep.subr.bf16.mxu0 0
    %252 = vmatpush1.bf16.msra.mxu0 %v243
    %253 = vmatprep.subr.bf16.mxu0 0
    %254 = vmatpush1.bf16.msra.mxu0 0
    %255 = vmatprep.subr.bf16.mxu0 0
    %256 = vmatpush1.bf16.msra.mxu0 0
    %257 = vmatprep.subr.bf16.mxu0 0
    %258 = vmatpush1.bf16.msra.mxu0 0
    %259 = vmatprep.subr.bf16.mxu0 0
    %260 = vmatpush1.bf16.msra.mxu0 0
    %261 = vmatprep.subr.bf16.mxu0 0
    %262 = vmatpush1.bf16.msra.mxu0 0
    %263 = vmatprep.subr.bf16.mxu0 0
    %264 = vmatpush1.bf16.msra.mxu0 0
    %265 = vmatprep.subr.bf16.mxu0 0
    %266 = vmatpush1.bf16.msra.mxu0 0
    %267 = vmatprep.subr.bf16.mxu0 0
    %268 = vmatpush1.bf16.msra.mxu0 0
    %269 = vmatprep.subr.bf16.mxu0 0
    %270 = vmatpush1.bf16.msra.mxu0 0
    %271 = vmatprep.subr.bf16.mxu0 0
    %272 = vmatpush1.bf16.msra.mxu0 0
    %273 = vmatprep.subr.bf16.mxu0 0
    %274 = vmatpush1.bf16.msra.mxu0 0
    %275 = vmatprep.subr.bf16.mxu0 0
    %276 = vmatpush1.bf16.msra.mxu0 0
    %277 = vmatprep.subr.bf16.mxu0 0
    %278 = vmatpush1.bf16.msra.mxu0 0
    %279 = vmatprep.subr.bf16.mxu0 0
    %280 = vmatpush1.bf16.msra.mxu0 0
    %281 = vmatprep.mubr.bf16.mxu0 0
    %282 = vmatmul.mubr.bf16.gmra.mrb[0].mxu0 %v247
    %v283 = vpop.f32.mrb[0].mxu0
    %v284 = vadd.f32 %v232, %v283
    %v285 = vpop.f32.mrb[0].mxu0
    %v286 = vpop.f32.mrb[0].mxu0
    %v287 = vpop.f32.mrb[0].mxu0
    %288 = vdwg.mxu0
    %vm289 = vcmask 125952
    %290 = vst.msk [vmem:[#allocation2] sm:$0xf] %vm289, %v284
    // Predicated region
    $region38: #{_siamese_core.5} parent=1 // pred_check
      _
    $region39: #{_siamese_core.5} parent=1 // pred_check_branch
      %292 = sbr.rel (0) target = $region41
    $region40: #{_siamese_core.5} parent=1 // pred_region
      %s294 = ssub.s32 64, 64
      %295 = vsyncadd [#allocation3], %s294
      %s297 = sshll.u32 [#allocation2], 4
      %s298 = int_to_ptr.vmem [resolvable:$true] %s297
      %300 = dma.vmem_to_hbm [thread:$0]  %s298, 64, %s9, [#allocation3]
    $region41: #{_siamese_core.5} parent=1 // pred_fallthru
      _
    // Predicated region
    $region42: #{_siamese_core.5} parent=1 // pred_check
      _
    $region43: #{_siamese_core.5} parent=1 // pred_check_branch
      %302 = sbr.rel (0) target = $region45
    $region44: #{_siamese_core.5} parent=1 // pred_region
      %303 = dma.done [#allocation3], 64
    $region45: #{_siamese_core.5} parent=1 // pred_fallthru
      _
    %304 = vsyncpa [#allocation3], 1

// kernel: _siamese_core.4
$region0: #{_siamese_core.4}
  #allocation0 [shape = 'u32[]', space=smem, size = 0x4, offset = 0x4, fixed_abs, tag = 'smem constant byte address 0x4 - core index']
  #allocation1 [shape = 'u32[144,128]{1,0:T(1,128)}', space=vmem, size = 0x12000, scoped, tag = 'internal scratch']
  %s0 = inlined_call_operand.vmem [shape: bf16[4,342,4], index: 0, kind: input, shape index: {}]
  %s1 = inlined_call_operand.vmem [shape: bf16[36,8], index: 1, kind: input, shape index: {}]
  %s2 = inlined_call_operand.vmem [shape: f32[1,8], index: 2, kind: input, shape index: {}]
  %s3 = inlined_call_operand.vmem [shape: f32[288,1], index: 3, kind: input, shape index: {}]
  %s4 = inlined_call_operand.vmem [shape: f32[4,1,8], index: 4, kind: output, shape index: {}]
  %s5 = sld [smem:[#allocation0]]
  $region49: #{_siamese_core.4} parent=0
    _
  %s7 = ssub.s32 1, %s5
  %s8 = scalar_select 0, %s7, %s5
  loop: start=0, step=1, limit=6
  $region2: #{_siamese_core.4} parent=0 // loop_pre_header
    _
  $region3: #{_siamese_core.4} parent=0 // loop_header
    %s10 = sphi 0, %s14
    %p11 = scmp.ge.s32.totalorder %s10, 6
    %s20 = sphi 0, %s22
    %s23 = sphi 0, %s20
    %s24 = sphi 0, %s23
    %s40 = sphi 0, %s24
    %s44 = sphi 0, %s44
    %s46 = sphi 0, %s44
    %s47 = sphi 0, %s46
    %s61 = sphi 0, %s47
    %s65 = sphi 0, %s65
    %s67 = sphi 0, %s65
    %s68 = sphi 0, %s67
    %s82 = sphi 0, %s68
    %s86 = sphi 0, %s86
    %s88 = sphi 0, %s86
    %s89 = sphi 0, %s88
    %s103 = sphi 0, %s89
    %s109 = sphi 0, %s111
    %s112 = sphi 0, %s109
    %s113 = sphi 0, %s112
    %s129 = sphi 0, %s113
  $region4: #{_siamese_core.4} parent=0 // loop_header_branch
    %13 = sbr.rel (%p11) target = $region8
  $region5: #{_siamese_core.4} parent=0 // loop_body
    %s15 = ssub.s32 %s10, 1
    %s16 = ssub.s32 %s10, 2
    %s17 = sadd.s32 %s10, 1
    %s18 = ssub.s32 %s10, %s17
    %p19 = scmp.eq.s32.totalorder %s18, 0
    %s21 = sadd.s32 %s20, 1
    %s22 = scalar_select %p19, %s20, %s21
    %p25 = pneg %p19
    %p26 = scmp.eq.s32.totalorder %s10, 3
    %p27 = por %p25, %p26
    %p28 = scmp.ne.s32.totalorder %s20, %s23
    %p29 = scmp.eq.s32.totalorder %s10, 0
    %p30 = por %p28, %p29
    %p31 = scmp.ne.s32.totalorder %s20, %s23
    %p32 = scmp.eq.s32.totalorder %s15, 3
    %p33 = por %p31, %p32
    %p34 = scmp.ne.s32.totalorder %s23, %s24
    %p35 = scmp.eq.s32.totalorder %s15, 0
    %p36 = por %p34, %p35
    %p37 = scmp.ne.s32.totalorder %s23, %s24
    %p38 = scmp.eq.s32.totalorder %s16, 3
    %p39 = por %p37, %p38
    %p41 = scmp.ne.s32.totalorder %s24, %s40
    %p42 = scmp.eq.s32.totalorder %s16, 0
    %p43 = por %p41, %p42
    %s45 = sadd.s32 %s44, 1
    %p48 = scmp.eq.s32.totalorder %s10, 3
    %p49 = scmp.ne.s32.totalorder %s44, %s46
    %p50 = scmp.eq.s32.totalorder %s10, 0
    %p51 = por %p49, %p50
    %p52 = scmp.ne.s32.totalorder %s44, %s46
    %p53 = scmp.eq.s32.totalorder %s15, 3
    %p54 = por %p52, %p53
    %p55 = scmp.ne.s32.totalorder %s46, %s47
    %p56 = scmp.eq.s32.totalorder %s15, 0
    %p57 = por %p55, %p56
    %p58 = scmp.ne.s32.totalorder %s46, %s47
    %p59 = scmp.eq.s32.totalorder %s16, 3
    %p60 = por %p58, %p59
    %p62 = scmp.ne.s32.totalorder %s47, %s61
    %p63 = scmp.eq.s32.totalorder %s16, 0
    %p64 = por %p62, %p63
    %s66 = sadd.s32 %s65, 1
    %p69 = scmp.eq.s32.totalorder %s10, 3
    %p70 = scmp.ne.s32.totalorder %s65, %s67
    %p71 = scmp.eq.s32.totalorder %s10, 0
    %p72 = por %p70, %p71
    %p73 = scmp.ne.s32.totalorder %s65, %s67
    %p74 = scmp.eq.s32.totalorder %s15, 3
    %p75 = por %p73, %p74
    %p76 = scmp.ne.s32.totalorder %s67, %s68
    %p77 = scmp.eq.s32.totalorder %s15, 0
    %p78 = por %p76, %p77
    %p79 = scmp.ne.s32.totalorder %s67, %s68
    %p80 = scmp.eq.s32.totalorder %s16, 3
    %p81 = por %p79, %p80
    %p83 = scmp.ne.s32.totalorder %s68, %s82
    %p84 = scmp.eq.s32.totalorder %s16, 0
    %p85 = por %p83, %p84
    %s87 = sadd.s32 %s86, 1
    %p90 = scmp.eq.s32.totalorder %s10, 3
    %p91 = scmp.ne.s32.totalorder %s86, %s88
    %p92 = scmp.eq.s32.totalorder %s10, 0
    %p93 = por %p91, %p92
    %p94 = scmp.ne.s32.totalorder %s86, %s88
    %p95 = scmp.eq.s32.totalorder %s15, 3
    %p96 = por %p94, %p95
    %p97 = scmp.ne.s32.totalorder %s88, %s89
    %p98 = scmp.eq.s32.totalorder %s15, 0
    %p99 = por %p97, %p98
    %p100 = scmp.ne.s32.totalorder %s88, %s89
    %p101 = scmp.eq.s32.totalorder %s16, 3
    %p102 = por %p100, %p101
    %p104 = scmp.ne.s32.totalorder %s89, %s103
    %p105 = scmp.eq.s32.totalorder %s16, 0
    %p106 = por %p104, %p105
    %s107 = ssub.s32 %s10, %s17
    %p108 = scmp.eq.s32.totalorder %s107, 0
    %s110 = sadd.s32 %s109, 1
    %s111 = scalar_select %p108, %s109, %s110
    %p114 = pneg %p108
    %p115 = scmp.eq.s32.totalorder %s10, 3
    %p116 = por %p114, %p115
    %p117 = scmp.ne.s32.totalorder %s109, %s112
    %p118 = scmp.eq.s32.totalorder %s10, 0
    %p119 = por %p117, %p118
    %p120 = scmp.ne.s32.totalorder %s109, %s112
    %p121 = scmp.eq.s32.totalorder %s15, 3
    %p122 = por %p120, %p121
    %p123 = scmp.ne.s32.totalorder %s112, %s113
    %p124 = scmp.eq.s32.totalorder %s15, 0
    %p125 = por %p123, %p124
    %p126 = scmp.ne.s32.totalorder %s112, %s113
    %p127 = scmp.eq.s32.totalorder %s16, 3
    %p128 = por %p126, %p127
    %p130 = scmp.ne.s32.totalorder %s113, %s129
    %p131 = scmp.eq.s32.totalorder %s16, 0
    %p132 = por %p130, %p131
    %p133 = scmp.le.s32.totalorder 1, %s10
    %p134 = scmp.lt.s32.totalorder %s10, 5
    %p135 = pnand %p133, %p134
    %p136 = pneg %p135
    // Predicated region
    $region9: #{_siamese_core.4} parent=5 // pred_check
      _
    $region10: #{_siamese_core.4} parent=5 // pred_check_branch
      %138 = sbr.rel (%p135) target = $region12
    $region11: #{_siamese_core.4} parent=5 // pred_region
      %s139 = ssub.s32 %s10, 1
      // Predicated region
      $region13: #{_siamese_core.4} parent=11 // pred_check
        %p140 = pneg %p57
      $region14: #{_siamese_core.4} parent=11 // pred_check_branch
        %142 = sbr.rel (%p140) target = $region16
      $region15: #{_siamese_core.4} parent=11 // pred_region
        _
      $region16: #{_siamese_core.4} parent=11 // pred_fallthru
        _
      // Predicated region
      $region17: #{_siamese_core.4} parent=11 // pred_check
        %p143 = pneg %p78
      $region18: #{_siamese_core.4} parent=11 // pred_check_branch
        %145 = sbr.rel (%p143) target = $region20
      $region19: #{_siamese_core.4} parent=11 // pred_region
        _
      $region20: #{_siamese_core.4} parent=11 // pred_fallthru
        _
      // Predicated region
      $region21: #{_siamese_core.4} parent=11 // pred_check
        %p146 = pneg %p99
      $region22: #{_siamese_core.4} parent=11 // pred_check_branch
        %148 = sbr.rel (%p146) target = $region24
      $region23: #{_siamese_core.4} parent=11 // pred_region
        _
      $region24: #{_siamese_core.4} parent=11 // pred_fallthru
        _
    $region12: #{_siamese_core.4} parent=5 // pred_fallthru
      _
    %p149 = scmp.lt.s32.totalorder %s10, 4
    // Predicated region
    $region25: #{_siamese_core.4} parent=5 // pred_check
      %p150 = pneg %p149
    $region26: #{_siamese_core.4} parent=5 // pred_check_branch
      %152 = sbr.rel (%p150) target = $region28
    $region27: #{_siamese_core.4} parent=5 // pred_region
      // Predicated region
      $region29: #{_siamese_core.4} parent=27 // pred_check
        %p153 = pneg %p30
      $region30: #{_siamese_core.4} parent=27 // pred_check_branch
        %155 = sbr.rel (%p153) target = $region32
      $region31: #{_siamese_core.4} parent=27 // pred_region
        %p156 = scmp.lt.s32.totalorder %s10, 3
        %s157 = scalar_select %p156, %s10, 3
        %s158 = smul.addr %s157, 43
        %s159 = smul.addr %s158, 4
        %s160 = scalar_lea.vmem %s0, %s159
      $region32: #{_siamese_core.4} parent=27 // pred_fallthru
        _
    $region28: #{_siamese_core.4} parent=5 // pred_fallthru
      _
    %p161 = scmp.le.s32.totalorder 1, %s10
    %p162 = scmp.lt.s32.totalorder %s10, 5
    %p163 = pnand %p161, %p162
    %p164 = pneg %p163
    // Predicated region
    $region33: #{_siamese_core.4} parent=5 // pred_check
      _
    $region34: #{_siamese_core.4} parent=5 // pred_check_branch
      %166 = sbr.rel (%p163) target = $region36
    $region35: #{_siamese_core.4} parent=5 // pred_region
      %s167 = ssub.s32 %s10, 1
      %p168 = scmp.lt.s32.totalorder %s15, 3
      %s169 = scalar_select %p168, %s15, 3
      %s170 = smul.addr %s169, 43
      %s171 = smul.addr %s170, 4
      %s172 = scalar_lea.vmem %s0, %s171
      %p173 = pneg %p36
      %p174 = pneg %p33
      %p175 = pneg %p57
      %p176 = pneg %p54
      %p177 = pneg %p78
      %p178 = pneg %p75
      %p179 = pneg %p99
      %p180 = pneg %p96
      %p181 = pneg %p125
      %p182 = pneg %p122
      %p183 = scmp.lt.s32.totalorder %s15, 3
      %s184 = scalar_select %p183, %s15, 3
      %s185 = scalar_lea.vmem %s4, %s184
      %p186 = scmp.lt.s32.totalorder %s15, 3
      %s187 = scalar_select %p186, %s15, 3
      %s188 = smul.addr %s187, 43
      %s189 = smul.addr %s188, 4
      %s190 = scalar_lea.vmem %s0, %s189
      %p191 = scmp.lt.s32.totalorder %s15, 3
      %s192 = scalar_select %p191, %s15, 3
      %s193 = scalar_lea.vmem %s4, %s192
      %v195 = vld [vmem:[%s190] sm:$0xf]
      %v196 = vld [vmem:[%s190 + $0x4] sm:$0xf]
      %v197 = vld [vmem:[%s190 + $0x8] sm:$0xf]
      %v198 = vld [vmem:[%s190 + $0xc] sm:$0xf]
      %v199 = vld [vmem:[%s190 + $0x10] sm:$0xf]
      %v200 = vld [vmem:[%s190 + $0x14] sm:$0xf]
      %v201 = vld [vmem:[%s190 + $0x18] sm:$0xf]
      %v202 = vld [vmem:[%s190 + $0x1c] sm:$0xf]
      %v203 = vld [vmem:[%s190 + $0x20] sm:$0xf]
      %v204 = vld [vmem:[%s190 + $0x24] sm:$0xf]
      %v205 = vld [vmem:[%s190 + $0x28] sm:$0xf]
      %v206 = vld [vmem:[%s190 + $0x2c] sm:$0xf]
      %v207 = vld [vmem:[%s190 + $0x30] sm:$0xf]
      %v208 = vld [vmem:[%s190 + $0x34] sm:$0xf]
      %v209 = vld [vmem:[%s190 + $0x38] sm:$0xf]
      %v210 = vld [vmem:[%s190 + $0x3c] sm:$0xf]
      %v211 = vld [vmem:[%s190 + $0x40] sm:$0xf]
      %v212 = vld [vmem:[%s190 + $0x44] sm:$0xf]
      %v213 = vld [vmem:[%s190 + $0x48] sm:$0xf]
      %v214 = vld [vmem:[%s190 + $0x4c] sm:$0xf]
      %v215 = vld [vmem:[%s190 + $0x50] sm:$0xf]
      %v216 = vld [vmem:[%s190 + $0x54] sm:$0xf]
      %v217 = vld [vmem:[%s190 + $0x58] sm:$0xf]
      %v218 = vld [vmem:[%s190 + $0x5c] sm:$0xf]
      %v219 = vld [vmem:[%s190 + $0x60] sm:$0xf]
      %v220 = vld [vmem:[%s190 + $0x64] sm:$0xf]
      %v221 = vld [vmem:[%s190 + $0x68] sm:$0xf]
      %v222 = vld [vmem:[%s190 + $0x6c] sm:$0xf]
      %v223 = vld [vmem:[%s190 + $0x70] sm:$0xf]
      %v224 = vld [vmem:[%s190 + $0x74] sm:$0xf]
      %v225 = vld [vmem:[%s190 + $0x78] sm:$0xf]
      %v226 = vld [vmem:[%s190 + $0x7c] sm:$0xf]
      %v227 = vld [vmem:[%s190 + $0x80] sm:$0xf]
      %v228 = vld [vmem:[%s190 + $0x84] sm:$0xf]
      %v229 = vld [vmem:[%s190 + $0x88] sm:$0xf]
      %v230 = vld [vmem:[%s190 + $0x8c] sm:$0xf]
      %v231 = vld [vmem:[%s190 + $0x90] sm:$0xf]
      %v232 = vld [vmem:[%s190 + $0x94] sm:$0xf]
      %v233 = vld [vmem:[%s190 + $0x98] sm:$0xf]
      %v234 = vld [vmem:[%s190 + $0x9c] sm:$0xf]
      %v235 = vld [vmem:[%s190 + $0xa0] sm:$0xf]
      %v272 = vunpack.c.l.b16 %v195
      %v273 = vunpack.c.l.b16 %v196
      %v274 = vunpack.c.l.b16 %v197
      %v275 = vunpack.c.l.b16 %v198
      %v276 = vunpack.c.l.b16 %v199
      %v277 = vunpack.c.l.b16 %v200
      %v278 = vunpack.c.l.b16 %v201
      %v279 = vunpack.c.l.b16 %v202
      %v280 = vunpack.c.l.b16 %v203
      %v281 = vunpack.c.l.b16 %v204
      %v282 = vunpack.c.l.b16 %v205
      %v283 = vunpack.c.l.b16 %v206
      %v284 = vunpack.c.l.b16 %v207
      %v285 = vunpack.c.l.b16 %v208
      %v286 = vunpack.c.l.b16 %v209
      %v287 = vunpack.c.l.b16 %v210
      %v288 = vunpack.c.l.b16 %v211
      %v289 = vunpack.c.l.b16 %v212
      %v290 = vunpack.c.l.b16 %v213
      %v291 = vunpack.c.l.b16 %v214
      %v292 = vunpack.c.l.b16 %v215
      %v293 = vunpack.c.l.b16 %v216
      %v294 = vunpack.c.l.b16 %v217
      %v295 = vunpack.c.l.b16 %v218
      %v296 = vunpack.c.l.b16 %v219
      %v297 = vunpack.c.l.b16 %v220
      %v298 = vunpack.c.l.b16 %v221
      %v299 = vunpack.c.l.b16 %v222
      %v300 = vunpack.c.l.b16 %v223
      %v301 = vunpack.c.l.b16 %v224
      %v302 = vunpack.c.l.b16 %v225
      %v303 = vunpack.c.l.b16 %v226
      %v304 = vunpack.c.l.b16 %v227
      %v305 = vunpack.c.l.b16 %v228
      %v306 = vunpack.c.l.b16 %v229
      %v307 = vunpack.c.l.b16 %v230
      %v308 = vpack.c.b16 %v273, %v272
      %v309 = vpack.c.b16 %v275, %v274
      %v310 = vpack.c.b16 %v277, %v276
      %v311 = vpack.c.b16 %v279, %v278
      %v312 = vpack.c.b16 %v281, %v280
      %v313 = vpack.c.b16 %v283, %v282
      %v314 = vpack.c.b16 %v285, %v284
      %v315 = vpack.c.b16 %v287, %v286
      %v316 = vpack.c.b16 %v289, %v288
      %v317 = vpack.c.b16 %v291, %v290
      %v318 = vpack.c.b16 %v293, %v292
      %v319 = vpack.c.b16 %v295, %v294
      %v320 = vpack.c.b16 %v297, %v296
      %v321 = vpack.c.b16 %v299, %v298
      %v322 = vpack.c.b16 %v301, %v300
      %v323 = vpack.c.b16 %v303, %v302
      %v324 = vpack.c.b16 %v305, %v304
      %v325 = vpack.c.b16 %v307, %v306
      %v327 = vunpack.c.l.b16 %v231
      %v328 = vpack.c.b16 %v327, %v327
      %vm329 = vsmask.f32 7424
      %v331 = vshrl.u32 %v308, 16
      %v333 = vshll.u32 %v308, 16
      %v335 = vrot.slane %v333, 1
      %v336 = vor.u32 %v331, %v335
      %v338 = vshll.u32 %v309, 16
      %v340 = vrot.slane %v338, 1
      %v341 = vsel %vm329, %v336, %v340
      %v342 = vshrl.u32 %v309, 16
      %v344 = vor.u32 %v342, %v340
      %v346 = vshll.u32 %v310, 16
      %v348 = vrot.slane %v346, 1
      %v349 = vsel %vm329, %v344, %v348
      %v350 = vshrl.u32 %v310, 16
      %v352 = vor.u32 %v350, %v348
      %v354 = vshll.u32 %v311, 16
      %v356 = vrot.slane %v354, 1
      %v357 = vsel %vm329, %v352, %v356
      %v358 = vshrl.u32 %v311, 16
      %v360 = vor.u32 %v358, %v356
      %v362 = vshll.u32 %v312, 16
      %v364 = vrot.slane %v362, 1
      %v365 = vsel %vm329, %v360, %v364
      %v366 = vshrl.u32 %v312, 16
      %v368 = vor.u32 %v366, %v364
      %v370 = vshll.u32 %v313, 16
      %v372 = vrot.slane %v370, 1
      %v373 = vsel %vm329, %v368, %v372
      %v374 = vshrl.u32 %v313, 16
      %v376 = vor.u32 %v374, %v372
      %v378 = vshll.u32 %v314, 16
      %v380 = vrot.slane %v378, 1
      %v381 = vsel %vm329, %v376, %v380
      %v382 = vshrl.u32 %v314, 16
      %v384 = vor.u32 %v382, %v380
      %v386 = vshll.u32 %v315, 16
      %v388 = vrot.slane %v386, 1
      %v389 = vsel %vm329, %v384, %v388
      %v390 = vshrl.u32 %v315, 16
      %v392 = vor.u32 %v390, %v388
      %v394 = vshll.u32 %v316, 16
      %v396 = vrot.slane %v394, 1
      %v397 = vsel %vm329, %v392, %v396
      %v398 = vshrl.u32 %v316, 16
      %v400 = vor.u32 %v398, %v396
      %v402 = vshll.u32 %v317, 16
      %v404 = vrot.slane %v402, 1
      %v405 = vsel %vm329, %v400, %v404
      %v406 = vshrl.u32 %v317, 16
      %v408 = vor.u32 %v406, %v404
      %v410 = vshll.u32 %v318, 16
      %v412 = vrot.slane %v410, 1
      %v413 = vsel %vm329, %v408, %v412
      %v414 = vshrl.u32 %v318, 16
      %v416 = vor.u32 %v414, %v412
      %v418 = vshll.u32 %v319, 16
      %v420 = vrot.slane %v418, 1
      %v421 = vsel %vm329, %v416, %v420
      %v422 = vshrl.u32 %v319, 16
      %v424 = vor.u32 %v422, %v420
      %v426 = vshll.u32 %v320, 16
      %v428 = vrot.slane %v426, 1
      %v429 = vsel %vm329, %v424, %v428
      %v430 = vshrl.u32 %v320, 16
      %v432 = vor.u32 %v430, %v428
      %v434 = vshll.u32 %v321, 16
      %v436 = vrot.slane %v434, 1
      %v437 = vsel %vm329, %v432, %v436
      %v438 = vshrl.u32 %v321, 16
      %v440 = vor.u32 %v438, %v436
      %v442 = vshll.u32 %v322, 16
      %v444 = vrot.slane %v442, 1
      %v445 = vsel %vm329, %v440, %v444
      %v446 = vshrl.u32 %v322, 16
      %v448 = vor.u32 %v446, %v444
      %v450 = vshll.u32 %v323, 16
      %v452 = vrot.slane %v450, 1
      %v453 = vsel %vm329, %v448, %v452
      %v454 = vshrl.u32 %v323, 16
      %v456 = vor.u32 %v454, %v452
      %v458 = vshll.u32 %v324, 16
      %v460 = vrot.slane %v458, 1
      %v461 = vsel %vm329, %v456, %v460
      %v462 = vshrl.u32 %v324, 16
      %v464 = vor.u32 %v462, %v460
      %v466 = vshll.u32 %v325, 16
      %v468 = vrot.slane %v466, 1
      %v469 = vsel %vm329, %v464, %v468
      %v470 = vshrl.u32 %v325, 16
      %v472 = vor.u32 %v470, %v468
      %v474 = vshll.u32 %v328, 16
      %v476 = vrot.slane %v474, 1
      %v477 = vsel %vm329, %v472, %v476
      %478 = vrot.lane.b32.xlu0 %v341, 4
      %v479 = vpop.permute.xlu0 %478
      %480 = vrot.lane.b32.xlu0 %v349, 4
      %v481 = vpop.permute.xlu0 %480
      %482 = vrot.lane.b32.xlu0 %v357, 4
      %v483 = vpop.permute.xlu0 %482
      %484 = vrot.lane.b32.xlu0 %v365, 4
      %v485 = vpop.permute.xlu0 %484
      %486 = vrot.lane.b32.xlu0 %v373, 4
      %v487 = vpop.permute.xlu0 %486
      %488 = vrot.lane.b32.xlu0 %v381, 4
      %v489 = vpop.permute.xlu0 %488
      %490 = vrot.lane.b32.xlu0 %v389, 4
      %v491 = vpop.permute.xlu0 %490
      %492 = vrot.lane.b32.xlu0 %v397, 4
      %v493 = vpop.permute.xlu0 %492
      %494 = vrot.lane.b32.xlu0 %v405, 4
      %v495 = vpop.permute.xlu0 %494
      %496 = vrot.lane.b32.xlu0 %v413, 4
      %v497 = vpop.permute.xlu0 %496
      %498 = vrot.lane.b32.xlu0 %v421, 4
      %v499 = vpop.permute.xlu0 %498
      %500 = vrot.lane.b32.xlu0 %v429, 4
      %v501 = vpop.permute.xlu0 %500
      %502 = vrot.lane.b32.xlu0 %v437, 4
      %v503 = vpop.permute.xlu0 %502
      %504 = vrot.lane.b32.xlu0 %v445, 4
      %v505 = vpop.permute.xlu0 %504
      %506 = vrot.lane.b32.xlu0 %v453, 4
      %v507 = vpop.permute.xlu0 %506
      %508 = vrot.lane.b32.xlu0 %v461, 4
      %v509 = vpop.permute.xlu0 %508
      %510 = vrot.lane.b32.xlu0 %v469, 4
      %v511 = vpop.permute.xlu0 %510
      %512 = vrot.lane.b32.xlu0 %v477, 4
      %v513 = vpop.permute.xlu0 %512
      %vm514 = vcmask 1046528
      %v515 = vrot.slane %v308, 1
      %v516 = vrot.slane %v309, 1
      %v517 = vsel %vm514, %v515, %v516
      %v518 = vrot.slane %v310, 1
      %v519 = vsel %vm514, %v516, %v518
      %v520 = vrot.slane %v311, 1
      %v521 = vsel %vm514, %v518, %v520
      %v522 = vrot.slane %v312, 1
      %v523 = vsel %vm514, %v520, %v522
      %v524 = vrot.slane %v313, 1
      %v525 = vsel %vm514, %v522, %v524
      %v526 = vrot.slane %v314, 1
      %v527 = vsel %vm514, %v524, %v526
      %v528 = vrot.slane %v315, 1
      %v529 = vsel %vm514, %v526, %v528
      %v530 = vrot.slane %v316, 1
      %v531 = vsel %vm514, %v528, %v530
      %v532 = vrot.slane %v317, 1
      %v533 = vsel %vm514, %v530, %v532
      %v534 = vrot.slane %v318, 1
      %v535 = vsel %vm514, %v532, %v534
      %v536 = vrot.slane %v319, 1
      %v537 = vsel %vm514, %v534, %v536
      %v538 = vrot.slane %v320, 1
      %v539 = vsel %vm514, %v536, %v538
      %v540 = vrot.slane %v321, 1
      %v541 = vsel %vm514, %v538, %v540
      %v542 = vrot.slane %v322, 1
      %v543 = vsel %vm514, %v540, %v542
      %v544 = vrot.slane %v323, 1
      %v545 = vsel %vm514, %v542, %v544
      %v546 = vrot.slane %v324, 1
      %v547 = vsel %vm514, %v544, %v546
      %v548 = vrot.slane %v325, 1
      %v549 = vsel %vm514, %v546, %v548
      %v550 = vrot.slane %v328, 1
      %v551 = vsel %vm514, %v548, %v550
      %552 = vrot.lane.b32.xlu0 %v517, 8
      %v553 = vpop.permute.xlu0 %552
      %554 = vrot.lane.b32.xlu0 %v519, 8
      %v555 = vpop.permute.xlu0 %554
      %556 = vrot.lane.b32.xlu0 %v521, 8
      %v557 = vpop.permute.xlu0 %556
      %558 = vrot.lane.b32.xlu0 %v523, 8
      %v559 = vpop.permute.xlu0 %558
      %560 = vrot.lane.b32.xlu0 %v525, 8
      %v561 = vpop.permute.xlu0 %560
      %562 = vrot.lane.b32.xlu0 %v527, 8
      %v563 = vpop.permute.xlu0 %562
      %564 = vrot.lane.b32.xlu0 %v529, 8
      %v565 = vpop.permute.xlu0 %564
      %566 = vrot.lane.b32.xlu0 %v531, 8
      %v567 = vpop.permute.xlu0 %566
      %568 = vrot.lane.b32.xlu0 %v533, 8
      %v569 = vpop.permute.xlu0 %568
      %570 = vrot.lane.b32.xlu0 %v535, 8
      %v571 = vpop.permute.xlu0 %570
      %572 = vrot.lane.b32.xlu0 %v537, 8
      %v573 = vpop.permute.xlu0 %572
      %574 = vrot.lane.b32.xlu0 %v539, 8
      %v575 = vpop.permute.xlu0 %574
      %576 = vrot.lane.b32.xlu0 %v541, 8
      %v577 = vpop.permute.xlu0 %576
      %578 = vrot.lane.b32.xlu0 %v543, 8
      %v579 = vpop.permute.xlu0 %578
      %580 = vrot.lane.b32.xlu0 %v545, 8
      %v581 = vpop.permute.xlu0 %580
      %582 = vrot.lane.b32.xlu0 %v547, 8
      %v583 = vpop.permute.xlu0 %582
      %584 = vrot.lane.b32.xlu0 %v549, 8
      %v585 = vpop.permute.xlu0 %584
      %586 = vrot.lane.b32.xlu0 %v551, 8
      %v587 = vpop.permute.xlu0 %586
      %v590 = vunpack.c.l.b16 %v232
      %v591 = vunpack.c.l.b16 %v233
      %v592 = vpack.c.b16 %v590, %v327
      %v593 = vpack.c.b16 %v591, %v591
      %v594 = vrot.slane %v592, 1
      %v595 = vsel %vm514, %v548, %v594
      %v596 = vrot.slane %v593, 1
      %v597 = vsel %vm514, %v594, %v596
      %598 = vrot.lane.b32.xlu0 %v519, 12
      %v599 = vpop.permute.xlu0 %598
      %600 = vrot.lane.b32.xlu0 %v521, 12
      %v601 = vpop.permute.xlu0 %600
      %602 = vrot.lane.b32.xlu0 %v523, 12
      %v603 = vpop.permute.xlu0 %602
      %604 = vrot.lane.b32.xlu0 %v525, 12
      %v605 = vpop.permute.xlu0 %604
      %606 = vrot.lane.b32.xlu0 %v527, 12
      %v607 = vpop.permute.xlu0 %606
      %608 = vrot.lane.b32.xlu0 %v529, 12
      %v609 = vpop.permute.xlu0 %608
      %610 = vrot.lane.b32.xlu0 %v531, 12
      %v611 = vpop.permute.xlu0 %610
      %612 = vrot.lane.b32.xlu0 %v533, 12
      %v613 = vpop.permute.xlu0 %612
      %614 = vrot.lane.b32.xlu0 %v535, 12
      %v615 = vpop.permute.xlu0 %614
      %616 = vrot.lane.b32.xlu0 %v537, 12
      %v617 = vpop.permute.xlu0 %616
      %618 = vrot.lane.b32.xlu0 %v539, 12
      %v619 = vpop.permute.xlu0 %618
      %620 = vrot.lane.b32.xlu0 %v541, 12
      %v621 = vpop.permute.xlu0 %620
      %622 = vrot.lane.b32.xlu0 %v543, 12
      %v623 = vpop.permute.xlu0 %622
      %624 = vrot.lane.b32.xlu0 %v545, 12
      %v625 = vpop.permute.xlu0 %624
      %626 = vrot.lane.b32.xlu0 %v547, 12
      %v627 = vpop.permute.xlu0 %626
      %628 = vrot.lane.b32.xlu0 %v549, 12
      %v629 = vpop.permute.xlu0 %628
      %630 = vrot.lane.b32.xlu0 %v595, 12
      %v631 = vpop.permute.xlu0 %630
      %632 = vrot.lane.b32.xlu0 %v597, 12
      %v633 = vpop.permute.xlu0 %632
      %vm634 = vsmask.f32 6400
      %v635 = vrot.slane %v342, 1
      %v636 = vrot.slane %v338, 2
      %v637 = vor.u32 %v635, %v636
      %v638 = vrot.slane %v350, 1
      %v639 = vrot.slane %v346, 2
      %v640 = vor.u32 %v638, %v639
      %v641 = vsel %vm634, %v637, %v640
      %v642 = vrot.slane %v358, 1
      %v643 = vrot.slane %v354, 2
      %v644 = vor.u32 %v642, %v643
      %v645 = vsel %vm634, %v640, %v644
      %v646 = vrot.slane %v366, 1
      %v647 = vrot.slane %v362, 2
      %v648 = vor.u32 %v646, %v647
      %v649 = vsel %vm634, %v644, %v648
      %v650 = vrot.slane %v374, 1
      %v651 = vrot.slane %v370, 2
      %v652 = vor.u32 %v650, %v651
      %v653 = vsel %vm634, %v648, %v652
      %v654 = vrot.slane %v382, 1
      %v655 = vrot.slane %v378, 2
      %v656 = vor.u32 %v654, %v655
      %v657 = vsel %vm634, %v652, %v656
      %v658 = vrot.slane %v390, 1
      %v659 = vrot.slane %v386, 2
      %v660 = vor.u32 %v658, %v659
      %v661 = vsel %vm634, %v656, %v660
      %v662 = vrot.slane %v398, 1
      %v663 = vrot.slane %v394, 2
      %v664 = vor.u32 %v662, %v663
      %v665 = vsel %vm634, %v660, %v664
      %v666 = vrot.slane %v406, 1
      %v667 = vrot.slane %v402, 2
      %v668 = vor.u32 %v666, %v667
      %v669 = vsel %vm634, %v664, %v668
      %v670 = vrot.slane %v414, 1
      %v671 = vrot.slane %v410, 2
      %v672 = vor.u32 %v670, %v671
      %v673 = vsel %vm634, %v668, %v672
      %v674 = vrot.slane %v422, 1
      %v675 = vrot.slane %v418, 2
      %v676 = vor.u32 %v674, %v675
      %v677 = vsel %vm634, %v672, %v676
      %v678 = vrot.slane %v430, 1
      %v679 = vrot.slane %v426, 2
      %v680 = vor.u32 %v678, %v679
      %v681 = vsel %vm634, %v676, %v680
      %v682 = vrot.slane %v438, 1
      %v683 = vrot.slane %v434, 2
      %v684 = vor.u32 %v682, %v683
      %v685 = vsel %vm634, %v680, %v684
      %v686 = vrot.slane %v446, 1
      %v687 = vrot.slane %v442, 2
      %v688 = vor.u32 %v686, %v687
      %v689 = vsel %vm634, %v684, %v688
      %v690 = vrot.slane %v454, 1
      %v691 = vrot.slane %v450, 2
      %v692 = vor.u32 %v690, %v691
      %v693 = vsel %vm634, %v688, %v692
      %v694 = vrot.slane %v462, 1
      %v695 = vrot.slane %v458, 2
      %v696 = vor.u32 %v694, %v695
      %v697 = vsel %vm634, %v692, %v696
      %v698 = vrot.slane %v470, 1
      %v699 = vrot.slane %v466, 2
      %v700 = vor.u32 %v698, %v699
      %v701 = vsel %vm634, %v696, %v700
      %v703 = vshrl.u32 %v592, 16
      %v705 = vrot.slane %v703, 1
      %v706 = vshll.u32 %v592, 16
      %v708 = vrot.slane %v706, 2
      %v709 = vor.u32 %v705, %v708
      %v710 = vsel %vm634, %v700, %v709
      %v712 = vshrl.u32 %v593, 16
      %v714 = vrot.slane %v712, 1
      %v715 = vshll.u32 %v593, 16
      %v717 = vrot.slane %v715, 2
      %v718 = vor.u32 %v714, %v717
      %v719 = vsel %vm634, %v709, %v718
      %720 = vrot.lane.b32.xlu0 %v641, 16
      %v721 = vpop.permute.xlu0 %720
      %722 = vrot.lane.b32.xlu0 %v645, 16
      %v723 = vpop.permute.xlu0 %722
      %724 = vrot.lane.b32.xlu0 %v649, 16
      %v725 = vpop.permute.xlu0 %724
      %726 = vrot.lane.b32.xlu0 %v653, 16
      %v727 = vpop.permute.xlu0 %726
      %728 = vrot.lane.b32.xlu0 %v657, 16
      %v729 = vpop.permute.xlu0 %728
      %730 = vrot.lane.b32.xlu0 %v661, 16
      %v731 = vpop.permute.xlu0 %730
      %732 = vrot.lane.b32.xlu0 %v665, 16
      %v733 = vpop.permute.xlu0 %732
      %734 = vrot.lane.b32.xlu0 %v669, 16
      %v735 = vpop.permute.xlu0 %734
      %736 = vrot.lane.b32.xlu0 %v673, 16
      %v737 = vpop.permute.xlu0 %736
      %738 = vrot.lane.b32.xlu0 %v677, 16
      %v739 = vpop.permute.xlu0 %738
      %740 = vrot.lane.b32.xlu0 %v681, 16
      %v741 = vpop.permute.xlu0 %740
      %742 = vrot.lane.b32.xlu0 %v685, 16
      %v743 = vpop.permute.xlu0 %742
      %744 = vrot.lane.b32.xlu0 %v689, 16
      %v745 = vpop.permute.xlu0 %744
      %746 = vrot.lane.b32.xlu0 %v693, 16
      %v747 = vpop.permute.xlu0 %746
      %748 = vrot.lane.b32.xlu0 %v697, 16
      %v749 = vpop.permute.xlu0 %748
      %750 = vrot.lane.b32.xlu0 %v701, 16
      %v751 = vpop.permute.xlu0 %750
      %752 = vrot.lane.b32.xlu0 %v710, 16
      %v753 = vpop.permute.xlu0 %752
      %754 = vrot.lane.b32.xlu0 %v719, 16
      %v755 = vpop.permute.xlu0 %754
      %vm756 = vcmask 1045504
      %v757 = vrot.slane %v309, 2
      %v758 = vrot.slane %v310, 2
      %v759 = vsel %vm756, %v757, %v758
      %v760 = vrot.slane %v311, 2
      %v761 = vsel %vm756, %v758, %v760
      %v762 = vrot.slane %v312, 2
      %v763 = vsel %vm756, %v760, %v762
      %v764 = vrot.slane %v313, 2
      %v765 = vsel %vm756, %v762, %v764
      %v766 = vrot.slane %v314, 2
      %v767 = vsel %vm756, %v764, %v766
      %v768 = vrot.slane %v315, 2
      %v769 = vsel %vm756, %v766, %v768
      %v770 = vrot.slane %v316, 2
      %v771 = vsel %vm756, %v768, %v770
      %v772 = vrot.slane %v317, 2
      %v773 = vsel %vm756, %v770, %v772
      %v774 = vrot.slane %v318, 2
      %v775 = vsel %vm756, %v772, %v774
      %v776 = vrot.slane %v319, 2
      %v777 = vsel %vm756, %v774, %v776
      %v778 = vrot.slane %v320, 2
      %v779 = vsel %vm756, %v776, %v778
      %v780 = vrot.slane %v321, 2
      %v781 = vsel %vm756, %v778, %v780
      %v782 = vrot.slane %v322, 2
      %v783 = vsel %vm756, %v780, %v782
      %v784 = vrot.slane %v323, 2
      %v785 = vsel %vm756, %v782, %v784
      %v786 = vrot.slane %v324, 2
      %v787 = vsel %vm756, %v784, %v786
      %v788 = vrot.slane %v325, 2
      %v789 = vsel %vm756, %v786, %v788
      %v790 = vrot.slane %v592, 2
      %v791 = vsel %vm756, %v788, %v790
      %v792 = vrot.slane %v593, 2
      %v793 = vsel %vm756, %v790, %v792
      %794 = vrot.lane.b32.xlu0 %v759, 20
      %v795 = vpop.permute.xlu0 %794
      %796 = vrot.lane.b32.xlu0 %v761, 20
      %v797 = vpop.permute.xlu0 %796
      %798 = vrot.lane.b32.xlu0 %v763, 20
      %v799 = vpop.permute.xlu0 %798
      %800 = vrot.lane.b32.xlu0 %v765, 20
      %v801 = vpop.permute.xlu0 %800
      %802 = vrot.lane.b32.xlu0 %v767, 20
      %v803 = vpop.permute.xlu0 %802
      %804 = vrot.lane.b32.xlu0 %v769, 20
      %v805 = vpop.permute.xlu0 %804
      %806 = vrot.lane.b32.xlu0 %v771, 20
      %v807 = vpop.permute.xlu0 %806
      %808 = vrot.lane.b32.xlu0 %v773, 20
      %v809 = vpop.permute.xlu0 %808
      %810 = vrot.lane.b32.xlu0 %v775, 20
      %v811 = vpop.permute.xlu0 %810
      %812 = vrot.lane.b32.xlu0 %v777, 20
      %v813 = vpop.permute.xlu0 %812
      %814 = vrot.lane.b32.xlu0 %v779, 20
      %v815 = vpop.permute.xlu0 %814
      %816 = vrot.lane.b32.xlu0 %v781, 20
      %v817 = vpop.permute.xlu0 %816
      %818 = vrot.lane.b32.xlu0 %v783, 20
      %v819 = vpop.permute.xlu0 %818
      %820 = vrot.lane.b32.xlu0 %v785, 20
      %v821 = vpop.permute.xlu0 %820
      %822 = vrot.lane.b32.xlu0 %v787, 20
      %v823 = vpop.permute.xlu0 %822
      %824 = vrot.lane.b32.xlu0 %v789, 20
      %v825 = vpop.permute.xlu0 %824
      %826 = vrot.lane.b32.xlu0 %v791, 20
      %v827 = vpop.permute.xlu0 %826
      %828 = vrot.lane.b32.xlu0 %v793, 20
      %v829 = vpop.permute.xlu0 %828
      %v832 = vunpack.c.l.b16 %v234
      %v833 = vunpack.c.l.b16 %v235
      %v834 = vpack.c.b16 %v832, %v591
      %v835 = vpack.c.b16 %v833, %v833
      %v836 = vrot.slane %v834, 2
      %v837 = vsel %vm756, %v790, %v836
      %v838 = vrot.slane %v835, 2
      %v839 = vsel %vm756, %v836, %v838
      %840 = vrot.lane.b32.xlu0 %v761, 24
      %v841 = vpop.permute.xlu0 %840
      %842 = vrot.lane.b32.xlu0 %v763, 24
      %v843 = vpop.permute.xlu0 %842
      %844 = vrot.lane.b32.xlu0 %v765, 24
      %v845 = vpop.permute.xlu0 %844
      %846 = vrot.lane.b32.xlu0 %v767, 24
      %v847 = vpop.permute.xlu0 %846
      %848 = vrot.lane.b32.xlu0 %v769, 24
      %v849 = vpop.permute.xlu0 %848
      %850 = vrot.lane.b32.xlu0 %v771, 24
      %v851 = vpop.permute.xlu0 %850
      %852 = vrot.lane.b32.xlu0 %v773, 24
      %v853 = vpop.permute.xlu0 %852
      %854 = vrot.lane.b32.xlu0 %v775, 24
      %v855 = vpop.permute.xlu0 %854
      %856 = vrot.lane.b32.xlu0 %v777, 24
      %v857 = vpop.permute.xlu0 %856
      %858 = vrot.lane.b32.xlu0 %v779, 24
      %v859 = vpop.permute.xlu0 %858
      %860 = vrot.lane.b32.xlu0 %v781, 24
      %v861 = vpop.permute.xlu0 %860
      %862 = vrot.lane.b32.xlu0 %v783, 24
      %v863 = vpop.permute.xlu0 %862
      %864 = vrot.lane.b32.xlu0 %v785, 24
      %v865 = vpop.permute.xlu0 %864
      %866 = vrot.lane.b32.xlu0 %v787, 24
      %v867 = vpop.permute.xlu0 %866
      %868 = vrot.lane.b32.xlu0 %v789, 24
      %v869 = vpop.permute.xlu0 %868
      %870 = vrot.lane.b32.xlu0 %v791, 24
      %v871 = vpop.permute.xlu0 %870
      %872 = vrot.lane.b32.xlu0 %v837, 24
      %v873 = vpop.permute.xlu0 %872
      %874 = vrot.lane.b32.xlu0 %v839, 24
      %v875 = vpop.permute.xlu0 %874
      %vm876 = vsmask.f32 5376
      %v877 = vrot.slane %v350, 2
      %v878 = vrot.slane %v346, 3
      %v879 = vor.u32 %v877, %v878
      %v880 = vrot.slane %v358, 2
      %v881 = vrot.slane %v354, 3
      %v882 = vor.u32 %v880, %v881
      %v883 = vsel %vm876, %v879, %v882
      %v884 = vrot.slane %v366, 2
      %v885 = vrot.slane %v362, 3
      %v886 = vor.u32 %v884, %v885
      %v887 = vsel %vm876, %v882, %v886
      %v888 = vrot.slane %v374, 2
      %v889 = vrot.slane %v370, 3
      %v890 = vor.u32 %v888, %v889
      %v891 = vsel %vm876, %v886, %v890
      %v892 = vrot.slane %v382, 2
      %v893 = vrot.slane %v378, 3
      %v894 = vor.u32 %v892, %v893
      %v895 = vsel %vm876, %v890, %v894
      %v896 = vrot.slane %v390, 2
      %v897 = vrot.slane %v386, 3
      %v898 = vor.u32 %v896, %v897
      %v899 = vsel %vm876, %v894, %v898
      %v900 = vrot.slane %v398, 2
      %v901 = vrot.slane %v394, 3
      %v902 = vor.u32 %v900, %v901
      %v903 = vsel %vm876, %v898, %v902
      %v904 = vrot.slane %v406, 2
      %v905 = vrot.slane %v402, 3
      %v906 = vor.u32 %v904, %v905
      %v907 = vsel %vm876, %v902, %v906
      %v908 = vrot.slane %v414, 2
      %v909 = vrot.slane %v410, 3
      %v910 = vor.u32 %v908, %v909
      %v911 = vsel %vm876, %v906, %v910
      %v912 = vrot.slane %v422, 2
      %v913 = vrot.slane %v418, 3
      %v914 = vor.u32 %v912, %v913
      %v915 = vsel %vm876, %v910, %v914
      %v916 = vrot.slane %v430, 2
      %v917 = vrot.slane %v426, 3
      %v918 = vor.u32 %v916, %v917
      %v919 = vsel %vm876, %v914, %v918
      %v920 = vrot.slane %v438, 2
      %v921 = vrot.slane %v434, 3
      %v922 = vor.u32 %v920, %v921
      %v923 = vsel %vm876, %v918, %v922
      %v924 = vrot.slane %v446, 2
      %v925 = vrot.slane %v442, 3
      %v926 = vor.u32 %v924, %v925
      %v927 = vsel %vm876, %v922, %v926
      %v928 = vrot.slane %v454, 2
      %v929 = vrot.slane %v450, 3
      %v930 = vor.u32 %v928, %v929
      %v931 = vsel %vm876, %v926, %v930
      %v932 = vrot.slane %v462, 2
      %v933 = vrot.slane %v458, 3
      %v934 = vor.u32 %v932, %v933
      %v935 = vsel %vm876, %v930, %v934
      %v936 = vrot.slane %v470, 2
      %v937 = vrot.slane %v466, 3
      %v938 = vor.u32 %v936, %v937
      %v939 = vsel %vm876, %v934, %v938
      %v940 = vrot.slane %v703, 2
      %v941 = vrot.slane %v706, 3
      %v942 = vor.u32 %v940, %v941
      %v943 = vsel %vm876, %v938, %v942
      %v945 = vshrl.u32 %v834, 16
      %v947 = vrot.slane %v945, 2
      %v948 = vshll.u32 %v834, 16
      %v950 = vrot.slane %v948, 3
      %v951 = vor.u32 %v947, %v950
      %v952 = vsel %vm876, %v942, %v951
      %v954 = vshrl.u32 %v835, 16
      %v956 = vrot.slane %v954, 2
      %v957 = vshll.u32 %v835, 16
      %v959 = vrot.slane %v957, 3
      %v960 = vor.u32 %v956, %v959
      %v961 = vsel %vm876, %v951, %v960
      %962 = vrot.lane.b32.xlu0 %v883, 28
      %v963 = vpop.permute.xlu0 %962
      %964 = vrot.lane.b32.xlu0 %v887, 28
      %v965 = vpop.permute.xlu0 %964
      %966 = vrot.lane.b32.xlu0 %v891, 28
      %v967 = vpop.permute.xlu0 %966
      %968 = vrot.lane.b32.xlu0 %v895, 28
      %v969 = vpop.permute.xlu0 %968
      %970 = vrot.lane.b32.xlu0 %v899, 28
      %v971 = vpop.permute.xlu0 %970
      %972 = vrot.lane.b32.xlu0 %v903, 28
      %v973 = vpop.permute.xlu0 %972
      %974 = vrot.lane.b32.xlu0 %v907, 28
      %v975 = vpop.permute.xlu0 %974
      %976 = vrot.lane.b32.xlu0 %v911, 28
      %v977 = vpop.permute.xlu0 %976
      %978 = vrot.lane.b32.xlu0 %v915, 28
      %v979 = vpop.permute.xlu0 %978
      %980 = vrot.lane.b32.xlu0 %v919, 28
      %v981 = vpop.permute.xlu0 %980
      %982 = vrot.lane.b32.xlu0 %v923, 28
      %v983 = vpop.permute.xlu0 %982
      %984 = vrot.lane.b32.xlu0 %v927, 28
      %v985 = vpop.permute.xlu0 %984
      %986 = vrot.lane.b32.xlu0 %v931, 28
      %v987 = vpop.permute.xlu0 %986
      %988 = vrot.lane.b32.xlu0 %v935, 28
      %v989 = vpop.permute.xlu0 %988
      %990 = vrot.lane.b32.xlu0 %v939, 28
      %v991 = vpop.permute.xlu0 %990
      %992 = vrot.lane.b32.xlu0 %v943, 28
      %v993 = vpop.permute.xlu0 %992
      %994 = vrot.lane.b32.xlu0 %v952, 28
      %v995 = vpop.permute.xlu0 %994
      %996 = vrot.lane.b32.xlu0 %v961, 28
      %v997 = vpop.permute.xlu0 %996
      %vm998 = vcmask 1044480
      %v999 = vrot.slane %v310, 3
      %v1000 = vrot.slane %v311, 3
      %v1001 = vsel %vm998, %v999, %v1000
      %v1002 = vrot.slane %v312, 3
      %v1003 = vsel %vm998, %v1000, %v1002
      %v1004 = vrot.slane %v313, 3
      %v1005 = vsel %vm998, %v1002, %v1004
      %v1006 = vrot.slane %v314, 3
      %v1007 = vsel %vm998, %v1004, %v1006
      %v1008 = vrot.slane %v315, 3
      %v1009 = vsel %vm998, %v1006, %v1008
      %v1010 = vrot.slane %v316, 3
      %v1011 = vsel %vm998, %v1008, %v1010
      %v1012 = vrot.slane %v317, 3
      %v1013 = vsel %vm998, %v1010, %v1012
      %v1014 = vrot.slane %v318, 3
      %v1015 = vsel %vm998, %v1012, %v1014
      %v1016 = vrot.slane %v319, 3
      %v1017 = vsel %vm998, %v1014, %v1016
      %v1018 = vrot.slane %v320, 3
      %v1019 = vsel %vm998, %v1016, %v1018
      %v1020 = vrot.slane %v321, 3
      %v1021 = vsel %vm998, %v1018, %v1020
      %v1022 = vrot.slane %v322, 3
      %v1023 = vsel %vm998, %v1020, %v1022
      %v1024 = vrot.slane %v323, 3
      %v1025 = vsel %vm998, %v1022, %v1024
      %v1026 = vrot.slane %v324, 3
      %v1027 = vsel %vm998, %v1024, %v1026
      %v1028 = vrot.slane %v325, 3
      %v1029 = vsel %vm998, %v1026, %v1028
      %v1030 = vrot.slane %v592, 3
      %v1031 = vsel %vm998, %v1028, %v1030
      %v1032 = vrot.slane %v834, 3
      %v1033 = vsel %vm998, %v1030, %v1032
      %v1034 = vrot.slane %v835, 3
      %v1035 = vsel %vm998, %v1032, %v1034
      %1036 = vrot.lane.b32.xlu0 %v1001, 32
      %v1037 = vpop.permute.xlu0 %1036
      %1038 = vrot.lane.b32.xlu0 %v1003, 32
      %v1039 = vpop.permute.xlu0 %1038
      %1040 = vrot.lane.b32.xlu0 %v1005, 32
      %v1041 = vpop.permute.xlu0 %1040
      %1042 = vrot.lane.b32.xlu0 %v1007, 32
      %v1043 = vpop.permute.xlu0 %1042
      %1044 = vrot.lane.b32.xlu0 %v1009, 32
      %v1045 = vpop.permute.xlu0 %1044
      %1046 = vrot.lane.b32.xlu0 %v1011, 32
      %v1047 = vpop.permute.xlu0 %1046
      %1048 = vrot.lane.b32.xlu0 %v1013, 32
      %v1049 = vpop.permute.xlu0 %1048
      %1050 = vrot.lane.b32.xlu0 %v1015, 32
      %v1051 = vpop.permute.xlu0 %1050
      %1052 = vrot.lane.b32.xlu0 %v1017, 32
      %v1053 = vpop.permute.xlu0 %1052
      %1054 = vrot.lane.b32.xlu0 %v1019, 32
      %v1055 = vpop.permute.xlu0 %1054
      %1056 = vrot.lane.b32.xlu0 %v1021, 32
      %v1057 = vpop.permute.xlu0 %1056
      %1058 = vrot.lane.b32.xlu0 %v1023, 32
      %v1059 = vpop.permute.xlu0 %1058
      %1060 = vrot.lane.b32.xlu0 %v1025, 32
      %v1061 = vpop.permute.xlu0 %1060
      %1062 = vrot.lane.b32.xlu0 %v1027, 32
      %v1063 = vpop.permute.xlu0 %1062
      %1064 = vrot.lane.b32.xlu0 %v1029, 32
      %v1065 = vpop.permute.xlu0 %1064
      %1066 = vrot.lane.b32.xlu0 %v1031, 32
      %v1067 = vpop.permute.xlu0 %1066
      %1068 = vrot.lane.b32.xlu0 %v1033, 32
      %v1069 = vpop.permute.xlu0 %1068
      %1070 = vrot.lane.b32.xlu0 %v1035, 32
      %v1071 = vpop.permute.xlu0 %1070
      %vm1072 = vcmask 31744
      %v1074 = vsel %vm1072, %v308, %v479
      %v1076 = vsel %vm1072, %v309, %v481
      %v1078 = vsel %vm1072, %v310, %v483
      %v1080 = vsel %vm1072, %v311, %v485
      %v1082 = vsel %vm1072, %v312, %v487
      %v1084 = vsel %vm1072, %v313, %v489
      %v1086 = vsel %vm1072, %v314, %v491
      %v1088 = vsel %vm1072, %v315, %v493
      %v1090 = vsel %vm1072, %v316, %v495
      %v1092 = vsel %vm1072, %v317, %v497
      %v1094 = vsel %vm1072, %v318, %v499
      %v1096 = vsel %vm1072, %v319, %v501
      %v1098 = vsel %vm1072, %v320, %v503
      %v1100 = vsel %vm1072, %v321, %v505
      %v1102 = vsel %vm1072, %v322, %v507
      %v1104 = vsel %vm1072, %v323, %v509
      %v1106 = vsel %vm1072, %v324, %v511
      %v1108 = vsel %vm1072, %v325, %v513
      %vm1109 = vcmask 64512
      %v1111 = vsel %vm1109, %v1074, %v553
      %v1113 = vsel %vm1109, %v1076, %v555
      %v1115 = vsel %vm1109, %v1078, %v557
      %v1117 = vsel %vm1109, %v1080, %v559
      %v1119 = vsel %vm1109, %v1082, %v561
      %v1121 = vsel %vm1109, %v1084, %v563
      %v1123 = vsel %vm1109, %v1086, %v565
      %v1125 = vsel %vm1109, %v1088, %v567
      %v1127 = vsel %vm1109, %v1090, %v569
      %v1129 = vsel %vm1109, %v1092, %v571
      %v1131 = vsel %vm1109, %v1094, %v573
      %v1133 = vsel %vm1109, %v1096, %v575
      %v1135 = vsel %vm1109, %v1098, %v577
      %v1137 = vsel %vm1109, %v1100, %v579
      %v1139 = vsel %vm1109, %v1102, %v581
      %v1141 = vsel %vm1109, %v1104, %v583
      %v1143 = vsel %vm1109, %v1106, %v585
      %v1145 = vsel %vm1109, %v1108, %v587
      %vm1146 = vcmask 97280
      %v1148 = vsel %vm1146, %v1111, %v599
      %v1150 = vsel %vm1146, %v1113, %v601
      %v1152 = vsel %vm1146, %v1115, %v603
      %v1154 = vsel %vm1146, %v1117, %v605
      %v1156 = vsel %vm1146, %v1119, %v607
      %v1158 = vsel %vm1146, %v1121, %v609
      %v1160 = vsel %vm1146, %v1123, %v611
      %v1162 = vsel %vm1146, %v1125, %v613
      %v1164 = vsel %vm1146, %v1127, %v615
      %v1166 = vsel %vm1146, %v1129, %v617
      %v1168 = vsel %vm1146, %v1131, %v619
      %v1170 = vsel %vm1146, %v1133, %v621
      %v1172 = vsel %vm1146, %v1135, %v623
      %v1174 = vsel %vm1146, %v1137, %v625
      %v1176 = vsel %vm1146, %v1139, %v627
      %v1178 = vsel %vm1146, %v1141, %v629
      %v1180 = vsel %vm1146, %v1143, %v631
      %v1182 = vsel %vm1146, %v1145, %v633
      %vm1183 = vcmask 130048
      %v1185 = vsel %vm1183, %v1148, %v721
      %v1187 = vsel %vm1183, %v1150, %v723
      %v1189 = vsel %vm1183, %v1152, %v725
      %v1191 = vsel %vm1183, %v1154, %v727
      %v1193 = vsel %vm1183, %v1156, %v729
      %v1195 = vsel %vm1183, %v1158, %v731
      %v1197 = vsel %vm1183, %v1160, %v733
      %v1199 = vsel %vm1183, %v1162, %v735
      %v1201 = vsel %vm1183, %v1164, %v737
      %v1203 = vsel %vm1183, %v1166, %v739
      %v1205 = vsel %vm1183, %v1168, %v741
      %v1207 = vsel %vm1183, %v1170, %v743
      %v1209 = vsel %vm1183, %v1172, %v745
      %v1211 = vsel %vm1183, %v1174, %v747
      %v1213 = vsel %vm1183, %v1176, %v749
      %v1215 = vsel %vm1183, %v1178, %v751
      %v1217 = vsel %vm1183, %v1180, %v753
      %v1219 = vsel %vm1183, %v1182, %v755
      %vm1220 = vcmask 162816
      %v1222 = vsel %vm1220, %v1185, %v795
      %v1224 = vsel %vm1220, %v1187, %v797
      %v1226 = vsel %vm1220, %v1189, %v799
      %v1228 = vsel %vm1220, %v1191, %v801
      %v1230 = vsel %vm1220, %v1193, %v803
      %v1232 = vsel %vm1220, %v1195, %v805
      %v1234 = vsel %vm1220, %v1197, %v807
      %v1236 = vsel %vm1220, %v1199, %v809
      %v1238 = vsel %vm1220, %v1201, %v811
      %v1240 = vsel %vm1220, %v1203, %v813
      %v1242 = vsel %vm1220, %v1205, %v815
      %v1244 = vsel %vm1220, %v1207, %v817
      %v1246 = vsel %vm1220, %v1209, %v819
      %v1248 = vsel %vm1220, %v1211, %v821
      %v1250 = vsel %vm1220, %v1213, %v823
      %v1252 = vsel %vm1220, %v1215, %v825
      %v1254 = vsel %vm1220, %v1217, %v827
      %v1256 = vsel %vm1220, %v1219, %v829
      %vm1257 = vcmask 195584
      %v1259 = vsel %vm1257, %v1222, %v841
      %v1261 = vsel %vm1257, %v1224, %v843
      %v1263 = vsel %vm1257, %v1226, %v845
      %v1265 = vsel %vm1257, %v1228, %v847
      %v1267 = vsel %vm1257, %v1230, %v849
      %v1269 = vsel %vm1257, %v1232, %v851
      %v1271 = vsel %vm1257, %v1234, %v853
      %v1273 = vsel %vm1257, %v1236, %v855
      %v1275 = vsel %vm1257, %v1238, %v857
      %v1277 = vsel %vm1257, %v1240, %v859
      %v1279 = vsel %vm1257, %v1242, %v861
      %v1281 = vsel %vm1257, %v1244, %v863
      %v1283 = vsel %vm1257, %v1246, %v865
      %v1285 = vsel %vm1257, %v1248, %v867
      %v1287 = vsel %vm1257, %v1250, %v869
      %v1289 = vsel %vm1257, %v1252, %v871
      %v1291 = vsel %vm1257, %v1254, %v873
      %v1293 = vsel %vm1257, %v1256, %v875
      %vm1294 = vcmask 228352
      %v1296 = vsel %vm1294, %v1259, %v963
      %v1298 = vsel %vm1294, %v1261, %v965
      %v1300 = vsel %vm1294, %v1263, %v967
      %v1302 = vsel %vm1294, %v1265, %v969
      %v1304 = vsel %vm1294, %v1267, %v971
      %v1306 = vsel %vm1294, %v1269, %v973
      %v1308 = vsel %vm1294, %v1271, %v975
      %v1310 = vsel %vm1294, %v1273, %v977
      %v1312 = vsel %vm1294, %v1275, %v979
      %v1314 = vsel %vm1294, %v1277, %v981
      %v1316 = vsel %vm1294, %v1279, %v983
      %v1318 = vsel %vm1294, %v1281, %v985
      %v1320 = vsel %vm1294, %v1283, %v987
      %v1322 = vsel %vm1294, %v1285, %v989
      %v1324 = vsel %vm1294, %v1287, %v991
      %v1326 = vsel %vm1294, %v1289, %v993
      %v1328 = vsel %vm1294, %v1291, %v995
      %v1330 = vsel %vm1294, %v1293, %v997
      %vm1331 = vcmask 261120
      %v1333 = vsel %vm1331, %v1296, %v1037
      %v1335 = vsel %vm1331, %v1298, %v1039
      %v1337 = vsel %vm1331, %v1300, %v1041
      %v1339 = vsel %vm1331, %v1302, %v1043
      %v1341 = vsel %vm1331, %v1304, %v1045
      %v1343 = vsel %vm1331, %v1306, %v1047
      %v1345 = vsel %vm1331, %v1308, %v1049
      %v1347 = vsel %vm1331, %v1310, %v1051
      %v1349 = vsel %vm1331, %v1312, %v1053
      %v1351 = vsel %vm1331, %v1314, %v1055
      %v1353 = vsel %vm1331, %v1316, %v1057
      %v1355 = vsel %vm1331, %v1318, %v1059
      %v1357 = vsel %vm1331, %v1320, %v1061
      %v1359 = vsel %vm1331, %v1322, %v1063
      %v1361 = vsel %vm1331, %v1324, %v1065
      %v1363 = vsel %vm1331, %v1326, %v1067
      %v1365 = vsel %vm1331, %v1328, %v1069
      %v1367 = vsel %vm1331, %v1330, %v1071
      %v1368 = vld [vmem:[%s1] sm:$0xf]
      %v1369 = vld [vmem:[%s1 + $0x4] sm:$0xf]
      %v1370 = vld [vmem:[%s1 + $0x8] sm:$0xf]
      %v1371 = vld [vmem:[%s1 + $0xc] sm:$0xf]
      %v1372 = vld [vmem:[%s1 + $0x10] sm:$0x3]
      %v1373 = vld [vmem:[%s2] sm:$0x1]
      %v1375 = vlaneseq
      %v1376 = vshrl.u32 %v1375, 7
      %v1377 = vsub.s32 0, %v1376
      %v1378 = vrot.slane %v1373, %v1377
      %v1385 = vunpack.c.l.b16 %v1368
      %v1386 = vunpack.c.l.b16 %v1369
      %v1387 = vunpack.c.l.b16 %v1370
      %v1388 = vunpack.c.l.b16 %v1371
      %v1389 = vunpack.c.l.b16 %v1372
      %v1390 = vpack.c.b16 %v1386, %v1385
      %v1391 = vpack.c.b16 %v1388, %v1387
      %v1392 = vpack.c.b16 %v1389, %v1389
      %vm1395 = vcmask 293888
      %v1396 = vsel %vm1395, %v1333, 0
      %v1398 = vsel %vm1395, %v1335, 0
      %v1400 = vsel %vm1395, %v1337, 0
      %v1402 = vsel %vm1395, %v1339, 0
      %v1404 = vsel %vm1395, %v1341, 0
      %v1406 = vsel %vm1395, %v1343, 0
      %v1408 = vsel %vm1395, %v1345, 0
      %v1410 = vsel %vm1395, %v1347, 0
      %v1412 = vsel %vm1395, %v1349, 0
      %v1414 = vsel %vm1395, %v1351, 0
      %v1416 = vsel %vm1395, %v1353, 0
      %v1418 = vsel %vm1395, %v1355, 0
      %v1420 = vsel %vm1395, %v1357, 0
      %v1422 = vsel %vm1395, %v1359, 0
      %v1424 = vsel %vm1395, %v1361, 0
      %v1426 = vsel %vm1395, %v1363, 0
      %v1428 = vsel %vm1395, %v1365, 0
      %v1430 = vsel %vm1395, %v1367, 0
      %vm1432 = vcmask 1041408
      %v1434 = vsel %vm1432, %v1392, 0
      %1436 = vmatprep.subr.bf16.mxu0 0
      %1437 = vmatpush1.bf16.msra.mxu0 %v1390
      %1438 = vmatprep.subr.bf16.mxu0 0
      %1439 = vmatpush1.bf16.msra.mxu0 %v1391
      %1440 = vmatprep.subr.bf16.mxu0 0
      %1441 = vmatpush1.bf16.msra.mxu0 %v1434
      %1442 = vmatprep.subr.bf16.mxu0 0
      %1443 = vmatpush1.bf16.msra.mxu0 0
      %1444 = vmatprep.subr.bf16.mxu0 0
      %1445 = vmatpush1.bf16.msra.mxu0 0
      %1446 = vmatprep.subr.bf16.mxu0 0
      %1447 = vmatpush1.bf16.msra.mxu0 0
      %1448 = vmatprep.subr.bf16.mxu0 0
      %1449 = vmatpush1.bf16.msra.mxu0 0
      %1450 = vmatprep.subr.bf16.mxu0 0
      %1451 = vmatpush1.bf16.msra.mxu0 0
      %1452 = vmatprep.subr.bf16.mxu0 0
      %1453 = vmatpush1.bf16.msra.mxu0 0
      %1454 = vmatprep.subr.bf16.mxu0 0
      %1455 = vmatpush1.bf16.msra.mxu0 0
      %1456 = vmatprep.subr.bf16.mxu0 0
      %1457 = vmatpush1.bf16.msra.mxu0 0
      %1458 = vmatprep.subr.bf16.mxu0 0
      %1459 = vmatpush1.bf16.msra.mxu0 0
      %1460 = vmatprep.subr.bf16.mxu0 0
      %1461 = vmatpush1.bf16.msra.mxu0 0
      %1462 = vmatprep.subr.bf16.mxu0 0
      %1463 = vmatpush1.bf16.msra.mxu0 0
      %1464 = vmatprep.subr.bf16.mxu0 0
      %1465 = vmatpush1.bf16.msra.mxu0 0
      %1466 = vmatprep.subr.bf16.mxu0 0
      %1467 = vmatpush1.bf16.msra.mxu0 0
      %1468 = vmatprep.mubr.bf16.mxu0 0
      %1469 = vmatmul.mubr.bf16.gmra.mrb[0].mxu0 %v1396
      %v1470 = vpop.f32.mrb[0].mxu0
      %v1471 = vadd.f32 %v1378, %v1470
      %v1472 = vpop.f32.mrb[0].mxu0
      %v1473 = vpop.f32.mrb[0].mxu0
      %v1474 = vadd.f32 %v1378, %v1473
      %v1475 = vpop.f32.mrb[0].mxu0
      %1476 = vmatprep.mubr.bf16.mxu0 0
      %1477 = vmatmul.mubr.bf16.gmra.mrb[0].mxu0 %v1398
      %v1478 = vpop.f32.mrb[0].mxu0
      %v1479 = vadd.f32 %v1378, %v1478
      %v1480 = vpop.f32.mrb[0].mxu0
      %v1481 = vpop.f32.mrb[0].mxu0
      %v1482 = vadd.f32 %v1378, %v1481
      %v1483 = vpop.f32.mrb[0].mxu0
      %1484 = vmatprep.mubr.bf16.mxu0 0
      %1485 = vmatmul.mubr.bf16.gmra.mrb[0].mxu0 %v1400
      %v1486 = vpop.f32.mrb[0].mxu0
      %v1487 = vadd.f32 %v1378, %v1486
      %v1488 = vpop.f32.mrb[0].mxu0
      %v1489 = vpop.f32.mrb[0].mxu0
      %v1490 = vadd.f32 %v1378, %v1489
      %v1491 = vpop.f32.mrb[0].mxu0
      %1492 = vmatprep.mubr.bf16.mxu0 0
      %1493 = vmatmul.mubr.bf16.gmra.mrb[0].mxu0 %v1402
      %v1494 = vpop.f32.mrb[0].mxu0
      %v1495 = vadd.f32 %v1378, %v1494
      %v1496 = vpop.f32.mrb[0].mxu0
      %v1497 = vpop.f32.mrb[0].mxu0
      %v1498 = vadd.f32 %v1378, %v1497
      %v1499 = vpop.f32.mrb[0].mxu0
      %1500 = vmatprep.mubr.bf16.mxu0 0
      %1501 = vmatmul.mubr.bf16.gmra.mrb[0].mxu0 %v1404
      %v1502 = vpop.f32.mrb[0].mxu0
      %v1503 = vadd.f32 %v1378, %v1502
      %v1504 = vpop.f32.mrb[0].mxu0
      %v1505 = vpop.f32.mrb[0].mxu0
      %v1506 = vadd.f32 %v1378, %v1505
      %v1507 = vpop.f32.mrb[0].mxu0
      %1508 = vmatprep.mubr.bf16.mxu0 0
      %1509 = vmatmul.mubr.bf16.gmra.mrb[0].mxu0 %v1406
      %v1510 = vpop.f32.mrb[0].mxu0
      %v1511 = vadd.f32 %v1378, %v1510
      %v1512 = vpop.f32.mrb[0].mxu0
      %v1513 = vpop.f32.mrb[0].mxu0
      %v1514 = vadd.f32 %v1378, %v1513
      %v1515 = vpop.f32.mrb[0].mxu0
      %1516 = vmatprep.mubr.bf16.mxu0 0
      %1517 = vmatmul.mubr.bf16.gmra.mrb[0].mxu0 %v1408
      %v1518 = vpop.f32.mrb[0].mxu0
      %v1519 = vadd.f32 %v1378, %v1518
      %v1520 = vpop.f32.mrb[0].mxu0
      %v1521 = vpop.f32.mrb[0].mxu0
      %v1522 = vadd.f32 %v1378, %v1521
      %v1523 = vpop.f32.mrb[0].mxu0
      %1524 = vmatprep.mubr.bf16.mxu0 0
      %1525 = vmatmul.mubr.bf16.gmra.mrb[0].mxu0 %v1410
      %v1526 = vpop.f32.mrb[0].mxu0
      %v1527 = vadd.f32 %v1378, %v1526
      %v1528 = vpop.f32.mrb[0].mxu0
      %v1529 = vpop.f32.mrb[0].mxu0
      %v1530 = vadd.f32 %v1378, %v1529
      %v1531 = vpop.f32.mrb[0].mxu0
      %1532 = vmatprep.mubr.bf16.mxu0 0
      %1533 = vmatmul.mubr.bf16.gmra.mrb[0].mxu0 %v1412
      %v1534 = vpop.f32.mrb[0].mxu0
      %v1535 = vadd.f32 %v1378, %v1534
      %v1536 = vpop.f32.mrb[0].mxu0
      %v1537 = vpop.f32.mrb[0].mxu0
      %v1538 = vadd.f32 %v1378, %v1537
      %v1539 = vpop.f32.mrb[0].mxu0
      %1540 = vmatprep.mubr.bf16.mxu0 0
      %1541 = vmatmul.mubr.bf16.gmra.mrb[0].mxu0 %v1414
      %v1542 = vpop.f32.mrb[0].mxu0
      %v1543 = vadd.f32 %v1378, %v1542
      %v1544 = vpop.f32.mrb[0].mxu0
      %v1545 = vpop.f32.mrb[0].mxu0
      %v1546 = vadd.f32 %v1378, %v1545
      %v1547 = vpop.f32.mrb[0].mxu0
      %1548 = vmatprep.mubr.bf16.mxu0 0
      %1549 = vmatmul.mubr.bf16.gmra.mrb[0].mxu0 %v1416
      %v1550 = vpop.f32.mrb[0].mxu0
      %v1551 = vadd.f32 %v1378, %v1550
      %v1552 = vpop.f32.mrb[0].mxu0
      %v1553 = vpop.f32.mrb[0].mxu0
      %v1554 = vadd.f32 %v1378, %v1553
      %v1555 = vpop.f32.mrb[0].mxu0
      %1556 = vmatprep.mubr.bf16.mxu0 0
      %1557 = vmatmul.mubr.bf16.gmra.mrb[0].mxu0 %v1418
      %v1558 = vpop.f32.mrb[0].mxu0
      %v1559 = vadd.f32 %v1378, %v1558
      %v1560 = vpop.f32.mrb[0].mxu0
      %v1561 = vpop.f32.mrb[0].mxu0
      %v1562 = vadd.f32 %v1378, %v1561
      %v1563 = vpop.f32.mrb[0].mxu0
      %1564 = vmatprep.mubr.bf16.mxu0 0
      %1565 = vmatmul.mubr.bf16.gmra.mrb[0].mxu0 %v1420
      %v1566 = vpop.f32.mrb[0].mxu0
      %v1567 = vadd.f32 %v1378, %v1566
      %v1568 = vpop.f32.mrb[0].mxu0
      %v1569 = vpop.f32.mrb[0].mxu0
      %v1570 = vadd.f32 %v1378, %v1569
      %v1571 = vpop.f32.mrb[0].mxu0
      %1572 = vmatprep.mubr.bf16.mxu0 0
      %1573 = vmatmul.mubr.bf16.gmra.mrb[0].mxu0 %v1422
      %v1574 = vpop.f32.mrb[0].mxu0
      %v1575 = vadd.f32 %v1378, %v1574
      %v1576 = vpop.f32.mrb[0].mxu0
      %v1577 = vpop.f32.mrb[0].mxu0
      %v1578 = vadd.f32 %v1378, %v1577
      %v1579 = vpop.f32.mrb[0].mxu0
      %1580 = vmatprep.mubr.bf16.mxu0 0
      %1581 = vmatmul.mubr.bf16.gmra.mrb[0].mxu0 %v1424
      %v1582 = vpop.f32.mrb[0].mxu0
      %v1583 = vadd.f32 %v1378, %v1582
      %v1584 = vpop.f32.mrb[0].mxu0
      %v1585 = vpop.f32.mrb[0].mxu0
      %v1586 = vadd.f32 %v1378, %v1585
      %v1587 = vpop.f32.mrb[0].mxu0
      %1588 = vmatprep.mubr.bf16.mxu0 0
      %1589 = vmatmul.mubr.bf16.gmra.mrb[0].mxu0 %v1426
      %v1590 = vpop.f32.mrb[0].mxu0
      %v1591 = vadd.f32 %v1378, %v1590
      %v1592 = vpop.f32.mrb[0].mxu0
      %v1593 = vpop.f32.mrb[0].mxu0
      %v1594 = vadd.f32 %v1378, %v1593
      %v1595 = vpop.f32.mrb[0].mxu0
      %1596 = vmatprep.mubr.bf16.mxu0 0
      %1597 = vmatmul.mubr.bf16.gmra.mrb[0].mxu0 %v1428
      %v1598 = vpop.f32.mrb[0].mxu0
      %v1599 = vadd.f32 %v1378, %v1598
      %v1600 = vpop.f32.mrb[0].mxu0
      %v1601 = vpop.f32.mrb[0].mxu0
      %v1602 = vadd.f32 %v1378, %v1601
      %v1603 = vpop.f32.mrb[0].mxu0
      %1604 = vmatprep.mubr.bf16.mxu0 0
      %1605 = vmatmul.mubr.bf16.gmra.mrb[0].mxu0 %v1430
      %v1606 = vpop.f32.mrb[0].mxu0
      %v1607 = vadd.f32 %v1378, %v1606
      %v1608 = vpop.f32.mrb[0].mxu0
      %v1609 = vpop.f32.mrb[0].mxu0
      %v1610 = vadd.f32 %v1378, %v1609
      %v1611 = vpop.f32.mrb[0].mxu0
      %1612 = vdwg.mxu0
      %v1613 = vmax.f32 %v1471, 0.0
      %v1614 = vmax.f32 %v1474, 0.0
      %v1615 = vmax.f32 %v1479, 0.0
      %v1616 = vmax.f32 %v1482, 0.0
      %v1617 = vmax.f32 %v1487, 0.0
      %v1618 = vmax.f32 %v1490, 0.0
      %v1619 = vmax.f32 %v1495, 0.0
      %v1620 = vmax.f32 %v1498, 0.0
      %v1621 = vmax.f32 %v1503, 0.0
      %v1622 = vmax.f32 %v1506, 0.0
      %v1623 = vmax.f32 %v1511, 0.0
      %v1624 = vmax.f32 %v1514, 0.0
      %v1625 = vmax.f32 %v1519, 0.0
      %v1626 = vmax.f32 %v1522, 0.0
      %v1627 = vmax.f32 %v1527, 0.0
      %v1628 = vmax.f32 %v1530, 0.0
      %v1629 = vmax.f32 %v1535, 0.0
      %v1630 = vmax.f32 %v1538, 0.0
      %v1631 = vmax.f32 %v1543, 0.0
      %v1632 = vmax.f32 %v1546, 0.0
      %v1633 = vmax.f32 %v1551, 0.0
      %v1634 = vmax.f32 %v1554, 0.0
      %v1635 = vmax.f32 %v1559, 0.0
      %v1636 = vmax.f32 %v1562, 0.0
      %v1637 = vmax.f32 %v1567, 0.0
      %v1638 = vmax.f32 %v1570, 0.0
      %v1639 = vmax.f32 %v1575, 0.0
      %v1640 = vmax.f32 %v1578, 0.0
      %v1641 = vmax.f32 %v1583, 0.0
      %v1642 = vmax.f32 %v1586, 0.0
      %v1643 = vmax.f32 %v1591, 0.0
      %v1644 = vmax.f32 %v1594, 0.0
      %v1645 = vmax.f32 %v1599, 0.0
      %v1646 = vmax.f32 %v1602, 0.0
      %v1647 = vmax.f32 %v1607, 0.0
      %v1648 = vmax.f32 %v1610, 0.0
      %v1649 = vld [vmem:[%s3] sm:$0xff]
      %v1650 = vld [vmem:[%s3 + $0x8] sm:$0xff]
      %v1651 = vld [vmem:[%s3 + $0x10] sm:$0xff]
      %v1652 = vld [vmem:[%s3 + $0x18] sm:$0xff]
      %v1653 = vld [vmem:[%s3 + $0x20] sm:$0xff]
      %v1654 = vld [vmem:[%s3 + $0x28] sm:$0xff]
      %v1655 = vld [vmem:[%s3 + $0x30] sm:$0xff]
      %v1656 = vld [vmem:[%s3 + $0x38] sm:$0xff]
      %v1657 = vld [vmem:[%s3 + $0x40] sm:$0xff]
      %v1658 = vld [vmem:[%s3 + $0x48] sm:$0xff]
      %v1659 = vld [vmem:[%s3 + $0x50] sm:$0xff]
      %v1660 = vld [vmem:[%s3 + $0x58] sm:$0xff]
      %v1661 = vld [vmem:[%s3 + $0x60] sm:$0xff]
      %v1662 = vld [vmem:[%s3 + $0x68] sm:$0xff]
      %v1663 = vld [vmem:[%s3 + $0x70] sm:$0xff]
      %v1664 = vld [vmem:[%s3 + $0x78] sm:$0xff]
      %v1665 = vld [vmem:[%s3 + $0x80] sm:$0xff]
      %v1666 = vld [vmem:[%s3 + $0x88] sm:$0xff]
      %v1667 = vld [vmem:[%s3 + $0x90] sm:$0xff]
      %v1668 = vld [vmem:[%s3 + $0x98] sm:$0xff]
      %v1669 = vld [vmem:[%s3 + $0xa0] sm:$0xff]
      %v1670 = vld [vmem:[%s3 + $0xa8] sm:$0xff]
      %v1671 = vld [vmem:[%s3 + $0xb0] sm:$0xff]
      %v1672 = vld [vmem:[%s3 + $0xb8] sm:$0xff]
      %v1673 = vld [vmem:[%s3 + $0xc0] sm:$0xff]
      %v1674 = vld [vmem:[%s3 + $0xc8] sm:$0xff]
      %v1675 = vld [vmem:[%s3 + $0xd0] sm:$0xff]
      %v1676 = vld [vmem:[%s3 + $0xd8] sm:$0xff]
      %v1677 = vld [vmem:[%s3 + $0xe0] sm:$0xff]
      %v1678 = vld [vmem:[%s3 + $0xe8] sm:$0xff]
      %v1679 = vld [vmem:[%s3 + $0xf0] sm:$0xff]
      %v1680 = vld [vmem:[%s3 + $0xf8] sm:$0xff]
      %v1681 = vld [vmem:[%s3 + $0x100] sm:$0xff]
      %v1682 = vld [vmem:[%s3 + $0x108] sm:$0xff]
      %v1683 = vld [vmem:[%s3 + $0x110] sm:$0xff]
      %v1684 = vld [vmem:[%s3 + $0x118] sm:$0xff]
      %1686 = vset.pattern.permute.xlu0 0
      %1687 = vperm.xlu0 %1686, %v1649
      %v1688 = vpop.permute.xlu0 %1687
      %1691 = vset.pattern.permute.xlu0 0
      %1692 = vperm.xlu0 %1691, %v1650
      %v1693 = vpop.permute.xlu0 %1692
      %1696 = vset.pattern.permute.xlu0 0
      %1697 = vperm.xlu0 %1696, %v1651
      %v1698 = vpop.permute.xlu0 %1697
      %1701 = vset.pattern.permute.xlu0 0
      %1702 = vperm.xlu0 %1701, %v1652
      %v1703 = vpop.permute.xlu0 %1702
      %1706 = vset.pattern.permute.xlu0 0
      %1707 = vperm.xlu0 %1706, %v1653
      %v1708 = vpop.permute.xlu0 %1707
      %1711 = vset.pattern.permute.xlu0 0
      %1712 = vperm.xlu0 %1711, %v1654
      %v1713 = vpop.permute.xlu0 %1712
      %1716 = vset.pattern.permute.xlu0 0
      %1717 = vperm.xlu0 %1716, %v1655
      %v1718 = vpop.permute.xlu0 %1717
      %1721 = vset.pattern.permute.xlu0 0
      %1722 = vperm.xlu0 %1721, %v1656
      %v1723 = vpop.permute.xlu0 %1722
      %1726 = vset.pattern.permute.xlu0 0
      %1727 = vperm.xlu0 %1726, %v1657
      %v1728 = vpop.permute.xlu0 %1727
      %1731 = vset.pattern.permute.xlu0 0
      %1732 = vperm.xlu0 %1731, %v1658
      %v1733 = vpop.permute.xlu0 %1732
      %1736 = vset.pattern.permute.xlu0 0
      %1737 = vperm.xlu0 %1736, %v1659
      %v1738 = vpop.permute.xlu0 %1737
      %1741 = vset.pattern.permute.xlu0 0
      %1742 = vperm.xlu0 %1741, %v1660
      %v1743 = vpop.permute.xlu0 %1742
      %1746 = vset.pattern.permute.xlu0 0
      %1747 = vperm.xlu0 %1746, %v1661
      %v1748 = vpop.permute.xlu0 %1747
      %1751 = vset.pattern.permute.xlu0 0
      %1752 = vperm.xlu0 %1751, %v1662
      %v1753 = vpop.permute.xlu0 %1752
      %1756 = vset.pattern.permute.xlu0 0
      %1757 = vperm.xlu0 %1756, %v1663
      %v1758 = vpop.permute.xlu0 %1757
      %1761 = vset.pattern.permute.xlu0 0
      %1762 = vperm.xlu0 %1761, %v1664
      %v1763 = vpop.permute.xlu0 %1762
      %1766 = vset.pattern.permute.xlu0 0
      %1767 = vperm.xlu0 %1766, %v1665
      %v1768 = vpop.permute.xlu0 %1767
      %1771 = vset.pattern.permute.xlu0 0
      %1772 = vperm.xlu0 %1771, %v1666
      %v1773 = vpop.permute.xlu0 %1772
      %1776 = vset.pattern.permute.xlu0 0
      %1777 = vperm.xlu0 %1776, %v1667
      %v1778 = vpop.permute.xlu0 %1777
      %1781 = vset.pattern.permute.xlu0 0
      %1782 = vperm.xlu0 %1781, %v1668
      %v1783 = vpop.permute.xlu0 %1782
      %1786 = vset.pattern.permute.xlu0 0
      %1787 = vperm.xlu0 %1786, %v1669
      %v1788 = vpop.permute.xlu0 %1787
      %1791 = vset.pattern.permute.xlu0 0
      %1792 = vperm.xlu0 %1791, %v1670
      %v1793 = vpop.permute.xlu0 %1792
      %1796 = vset.pattern.permute.xlu0 0
      %1797 = vperm.xlu0 %1796, %v1671
      %v1798 = vpop.permute.xlu0 %1797
      %1801 = vset.pattern.permute.xlu0 0
      %1802 = vperm.xlu0 %1801, %v1672
      %v1803 = vpop.permute.xlu0 %1802
      %1806 = vset.pattern.permute.xlu0 0
      %1807 = vperm.xlu0 %1806, %v1673
      %v1808 = vpop.permute.xlu0 %1807
      %1811 = vset.pattern.permute.xlu0 0
      %1812 = vperm.xlu0 %1811, %v1674
      %v1813 = vpop.permute.xlu0 %1812
      %1816 = vset.pattern.permute.xlu0 0
      %1817 = vperm.xlu0 %1816, %v1675
      %v1818 = vpop.permute.xlu0 %1817
      %1821 = vset.pattern.permute.xlu0 0
      %1822 = vperm.xlu0 %1821, %v1676
      %v1823 = vpop.permute.xlu0 %1822
      %1826 = vset.pattern.permute.xlu0 0
      %1827 = vperm.xlu0 %1826, %v1677
      %v1828 = vpop.permute.xlu0 %1827
      %1831 = vset.pattern.permute.xlu0 0
      %1832 = vperm.xlu0 %1831, %v1678
      %v1833 = vpop.permute.xlu0 %1832
      %1836 = vset.pattern.permute.xlu0 0
      %1837 = vperm.xlu0 %1836, %v1679
      %v1838 = vpop.permute.xlu0 %1837
      %1841 = vset.pattern.permute.xlu0 0
      %1842 = vperm.xlu0 %1841, %v1680
      %v1843 = vpop.permute.xlu0 %1842
      %1846 = vset.pattern.permute.xlu0 0
      %1847 = vperm.xlu0 %1846, %v1681
      %v1848 = vpop.permute.xlu0 %1847
      %1851 = vset.pattern.permute.xlu0 0
      %1852 = vperm.xlu0 %1851, %v1682
      %v1853 = vpop.permute.xlu0 %1852
      %1856 = vset.pattern.permute.xlu0 0
      %1857 = vperm.xlu0 %1856, %v1683
      %v1858 = vpop.permute.xlu0 %1857
      %1861 = vset.pattern.permute.xlu0 0
      %1862 = vperm.xlu0 %1861, %v1684
      %v1863 = vpop.permute.xlu0 %1862
      %v1865 = vmul.f32 %v1613, %v1688
      %v1866 = vmul.f32 %v1614, %v1693
      %v1867 = vmul.f32 %v1615, %v1698
      %v1868 = vmul.f32 %v1616, %v1703
      %v1869 = vmul.f32 %v1617, %v1708
      %v1870 = vmul.f32 %v1618, %v1713
      %v1871 = vmul.f32 %v1619, %v1718
      %v1872 = vmul.f32 %v1620, %v1723
      %v1873 = vmul.f32 %v1621, %v1728
      %v1874 = vmul.f32 %v1622, %v1733
      %v1875 = vmul.f32 %v1623, %v1738
      %v1876 = vmul.f32 %v1624, %v1743
      %v1877 = vmul.f32 %v1625, %v1748
      %v1878 = vmul.f32 %v1626, %v1753
      %v1879 = vmul.f32 %v1627, %v1758
      %v1880 = vmul.f32 %v1628, %v1763
      %v1881 = vmul.f32 %v1629, %v1768
      %v1882 = vmul.f32 %v1630, %v1773
      %v1883 = vmul.f32 %v1631, %v1778
      %v1884 = vmul.f32 %v1632, %v1783
      %v1885 = vmul.f32 %v1633, %v1788
      %v1886 = vmul.f32 %v1634, %v1793
      %v1887 = vmul.f32 %v1635, %v1798
      %v1888 = vmul.f32 %v1636, %v1803
      %v1889 = vmul.f32 %v1637, %v1808
      %v1890 = vmul.f32 %v1638, %v1813
      %v1891 = vmul.f32 %v1639, %v1818
      %v1892 = vmul.f32 %v1640, %v1823
      %v1893 = vmul.f32 %v1641, %v1828
      %v1894 = vmul.f32 %v1642, %v1833
      %v1895 = vmul.f32 %v1643, %v1838
      %v1896 = vmul.f32 %v1644, %v1843
      %v1897 = vmul.f32 %v1645, %v1848
      %v1898 = vmul.f32 %v1646, %v1853
      %v1899 = vmul.f32 %v1647, %v1858
      %v1900 = vmul.f32 %v1648, %v1863
      %v1901 = vsel %vm1109, %v1865, 0.0
      %v1902 = vsel %vm1109, %v1866, 0.0
      %v1903 = vadd.f32 %v1901, %v1902
      %v1904 = vsel %vm1109, %v1867, 0.0
      %v1905 = vadd.f32 %v1903, %v1904
      %v1906 = vsel %vm1109, %v1868, 0.0
      %v1907 = vadd.f32 %v1905, %v1906
      %v1908 = vsel %vm1109, %v1869, 0.0
      %v1909 = vadd.f32 %v1907, %v1908
      %v1910 = vsel %vm1109, %v1870, 0.0
      %v1911 = vadd.f32 %v1909, %v1910
      %v1912 = vsel %vm1109, %v1871, 0.0
      %v1913 = vadd.f32 %v1911, %v1912
      %v1914 = vsel %vm1109, %v1872, 0.0
      %v1915 = vadd.f32 %v1913, %v1914
      %v1916 = vsel %vm1109, %v1873, 0.0
      %v1917 = vadd.f32 %v1915, %v1916
      %v1918 = vsel %vm1109, %v1874, 0.0
      %v1919 = vadd.f32 %v1917, %v1918
      %v1920 = vsel %vm1109, %v1875, 0.0
      %v1921 = vadd.f32 %v1919, %v1920
      %v1922 = vsel %vm1109, %v1876, 0.0
      %v1923 = vadd.f32 %v1921, %v1922
      %v1924 = vsel %vm1109, %v1877, 0.0
      %v1925 = vadd.f32 %v1923, %v1924
      %v1926 = vsel %vm1109, %v1878, 0.0
      %v1927 = vadd.f32 %v1925, %v1926
      %v1928 = vsel %vm1109, %v1879, 0.0
      %v1929 = vadd.f32 %v1927, %v1928
      %v1930 = vsel %vm1109, %v1880, 0.0
      %v1931 = vadd.f32 %v1929, %v1930
      %v1932 = vsel %vm1109, %v1881, 0.0
      %v1933 = vadd.f32 %v1931, %v1932
      %v1934 = vsel %vm1109, %v1882, 0.0
      %v1935 = vadd.f32 %v1933, %v1934
      %v1936 = vsel %vm1109, %v1883, 0.0
      %v1937 = vadd.f32 %v1935, %v1936
      %v1938 = vsel %vm1109, %v1884, 0.0
      %v1939 = vadd.f32 %v1937, %v1938
      %v1940 = vsel %vm1109, %v1885, 0.0
      %v1941 = vadd.f32 %v1939, %v1940
      %v1942 = vsel %vm1109, %v1886, 0.0
      %v1943 = vadd.f32 %v1941, %v1942
      %v1944 = vsel %vm1109, %v1887, 0.0
      %v1945 = vadd.f32 %v1943, %v1944
      %v1946 = vsel %vm1109, %v1888, 0.0
      %v1947 = vadd.f32 %v1945, %v1946
      %v1948 = vsel %vm1109, %v1889, 0.0
      %v1949 = vadd.f32 %v1947, %v1948
      %v1950 = vsel %vm1109, %v1890, 0.0
      %v1951 = vadd.f32 %v1949, %v1950
      %v1952 = vsel %vm1109, %v1891, 0.0
      %v1953 = vadd.f32 %v1951, %v1952
      %v1954 = vsel %vm1109, %v1892, 0.0
      %v1955 = vadd.f32 %v1953, %v1954
      %v1956 = vsel %vm1109, %v1893, 0.0
      %v1957 = vadd.f32 %v1955, %v1956
      %v1958 = vsel %vm1109, %v1894, 0.0
      %v1959 = vadd.f32 %v1957, %v1958
      %v1960 = vsel %vm1109, %v1895, 0.0
      %v1961 = vadd.f32 %v1959, %v1960
      %v1962 = vsel %vm1109, %v1896, 0.0
      %v1963 = vadd.f32 %v1961, %v1962
      %v1964 = vsel %vm1109, %v1897, 0.0
      %v1965 = vadd.f32 %v1963, %v1964
      %v1966 = vsel %vm1109, %v1898, 0.0
      %v1967 = vadd.f32 %v1965, %v1966
      %v1968 = vsel %vm1109, %v1899, 0.0
      %v1969 = vadd.f32 %v1967, %v1968
      %v1970 = vsel %vm1109, %v1900, 0.0
      %v1971 = vadd.f32 %v1969, %v1970
      %v1972 = vrot.slane %v1971, 4
      %v1973 = vadd.f32 %v1971, %v1972
      %v1974 = vrot.slane %v1973, 2
      %v1975 = vadd.f32 %v1973, %v1974
      %v1976 = vrot.slane %v1975, 1
      %v1977 = vadd.f32 %v1975, %v1976
      %vm1978 = vcmask 57344
      %1979 = vst.msk [vmem:[%s193] sm:$0x1] %vm1978, %v1977
      %p1980 = scmp.lt.s32.totalorder %s15, 3
      %s1981 = scalar_select %p1980, %s15, 3
      %s1982 = scalar_lea.vmem %s4, %s1981
      // Predicated region
      $region37: #{_siamese_core.4} parent=35 // pred_check
        %p1983 = pneg %p122
      $region38: #{_siamese_core.4} parent=35 // pred_check_branch
        %1985 = sbr.rel (%p1983) target = $region40
      $region39: #{_siamese_core.4} parent=35 // pred_region
        _
      $region40: #{_siamese_core.4} parent=35 // pred_fallthru
        _
    $region36: #{_siamese_core.4} parent=5 // pred_fallthru
      _
    %p1986 = scmp.le.s32.totalorder 2, %s10
    // Predicated region
    $region41: #{_siamese_core.4} parent=5 // pred_check
      %p1987 = pneg %p1986
    $region42: #{_siamese_core.4} parent=5 // pred_check_branch
      %1989 = sbr.rel (%p1987) target = $region44
    $region43: #{_siamese_core.4} parent=5 // pred_region
      %s1990 = ssub.s32 %s10, 2
      // Predicated region
      $region45: #{_siamese_core.4} parent=43 // pred_check
        %p1991 = pneg %p128
      $region46: #{_siamese_core.4} parent=43 // pred_check_branch
        %1993 = sbr.rel (%p1991) target = $region48
      $region47: #{_siamese_core.4} parent=43 // pred_region
        %p1994 = scmp.lt.s32.totalorder %s16, 3
        %s1995 = scalar_select %p1994, %s16, 3
        %s1996 = scalar_lea.vmem %s4, %s1995
      $region48: #{_siamese_core.4} parent=43 // pred_fallthru
        _
    $region44: #{_siamese_core.4} parent=5 // pred_fallthru
      _
  $region6: #{_siamese_core.4} parent=0 // loop_footer
    %s14 = sadd.s32 1, %s10
  $region7: #{_siamese_core.4} parent=0 // loop_footer_branch
    %9 = sbr.rel target = $region3
  $region8: #{_siamese_core.4} parent=0 // loop_exit
    _

</llo_original>
